<compile_context>
chip_gen: v7x
topology: tpu7x:2x2x1
jax: 0.10.0
libtpu: 0.0.40
codegen_flags: <defaults>
</compile_context>

<pallas_src>
import numpy as np
import jax
import jax.numpy as jnp
from jax.experimental import pallas as pl
from jax.experimental.pallas import tpu as pltpu


# --------------------------------------------------------------------------------------
# Kernel
# --------------------------------------------------------------------------------------
def primal_attention_kernel(x_ref, wqk_ref, seg_ref, segt_ref, we_ref, wr_ref,
                            per_ref, bias_ref, out_ref, e_ref, r_ref):
    f32 = jnp.float32
    bf16 = jnp.bfloat16
    C = x_ref.shape[-1]

    x = x_ref[0]                                                   # (tn, C) bf16

    # Fused q/k projection: one (tn, C) @ (C, 2C) MXU pass, slice at column C
    # (free relayout when C % 128 == 0, the usual ViT case).
    qk = jnp.dot(x, wqk_ref[...], preferred_element_type=f32)      # (tn, 2C) f32
    q = qk[:, :C]
    k = qk[:, C:]

    # Per-head L2 normalize (torch F.normalize, p=2, dim=-1, eps=1e-12).
    # Segmented reduce C->H and broadcast H->C via constant 0/1 bf16 matmuls (keeps
    # everything 2-D and lane-dense, bf16 MXU operands); rsqrt goes to the EUP.
    eps2 = jnp.float32(1e-24)                                      # eps ** 2
    seg = seg_ref[...]                                             # (C, H) bf16 0/1
    segt = segt_ref[...]                                           # (H, C) bf16 0/1

    def l2_normalize(v):                                           # v: (tn, C) f32
        s = jnp.dot((v * v).astype(bf16), seg, preferred_element_type=f32)   # (tn, H)
        inv = jax.lax.rsqrt(jnp.maximum(s, eps2))                  # == 1 / max(||v||_2, eps)
        scale = jnp.dot(inv.astype(bf16), segt, preferred_element_type=f32)  # (tn, C)
        return (v * scale).astype(bf16)

    qn = l2_normalize(q)
    kn = l2_normalize(k)

    # e/r scores for all heads with ONE MXU matmul each against the per-batch packed
    # block-diagonal low-rank weights (precomputed in the wrapper, streamed per b).
    # HE is padded to a multiple of 128 -> lane-dense (tn, HE_pad) results and stores.
    esc = jnp.dot(qn, we_ref[0], preferred_element_type=f32)       # (tn, HE_pad) f32
    rsc = jnp.dot(kn, wr_ref[0], preferred_element_type=f32)
    e_ref[0] = esc
    r_ref[0] = rsc

    # concate_weight + output projection pre-folded (parameter-only) into a single
    # (2*HE_pad, C) matrix:  out = [esc | rsc] @ P_ER + fused bias.
    # The concat sits on a 128-lane boundary (HE_pad % 128 == 0) -> free.
    score = jnp.concatenate([esc, rsc], axis=-1).astype(bf16)      # (tn, 2*HE_pad) bf16
    out = jnp.dot(score, per_ref[...], preferred_element_type=f32) + bias_ref[...]
    out_ref[0] = out.astype(out_ref.dtype)
    # attn_drop / proj_drop with p=0.0 are identities (eval semantics); nothing to do.


# --------------------------------------------------------------------------------------
# Tiling / VMEM planning (generation aware)
# --------------------------------------------------------------------------------------
def _round_up(v, m):
    return ((v + m - 1) // m) * m


def _vmem_capacity_bytes():
    try:
        return int(pltpu.get_tpu_info().vmem_capacity_bytes)
    except Exception:
        return 64 * 1024 * 1024      # conservative (v7x per-TC share); safe everywhere


def _footprint_bytes(tn, c, he_pad, out_bytes):
    bf, f32w = 2, 4
    # double-buffered per-step tiles (x in, out + escore + rscore out)
    tiles = 2 * (tn * c * bf + tn * c * out_bytes + 2 * tn * he_pad * f32w)
    # weights resident in VMEM (constants single-buffered; per-batch w_e/w_r x2 buffers)
    weights = (c * 2 * c * bf                    # wqk^T
               + 2 * max(c, 8) * 128 * bf        # seg / seg^T (lane padding)
               + 2 * 2 * c * he_pad * bf         # w_e, w_r
               + 2 * he_pad * c * bf             # fused P_ER
               + 128 * f32w)                     # bias
    # in-kernel f32 intermediates (qk, scale, esc/rsc values) + slack
    interm = tn * 2 * c * f32w + 2 * tn * he_pad * f32w + tn * c * f32w
    return int(1.25 * (tiles + weights + interm))


def _plan_tiling(n, c, he_pad, out_bytes, vmem_cap):
    budget = int(0.70 * vmem_cap)
    n_pad = n if n <= 128 else _round_up(n, 128)
    # per-generation max tile: 1024 on 128-MiB parts (v5e/v6e), 512 on v7x (256 if C large)
    if vmem_cap >= 96 * 1024 * 1024:
        cands = (1024, 512, 256, 128)
    elif c >= 1024:
        cands = (256, 128)
    else:
        cands = (512, 256, 128)
    tn = min(n_pad, 128) if n_pad % 128 == 0 else n_pad
    for cand in cands:
        if n_pad % cand == 0 and _footprint_bytes(cand, c, he_pad, out_bytes) <= budget:
            tn = cand
            break
    return n_pad, tn, budget


# --------------------------------------------------------------------------------------
# Parameters (mirror the torch module's tensors)
# --------------------------------------------------------------------------------------
def make_params(key, dim, num_heads, embed_len, low_rank, rank_multi):
    H = num_heads
    Dh = dim // H
    E = low_rank
    Rsel = min(embed_len, low_rank * rank_multi)
    ks = jax.random.split(key, 8)
    return {
        "wqk": jax.random.normal(ks[0], (2 * dim, dim), jnp.float32) * 0.05,
        "we": jax.random.normal(ks[1], (H, Rsel, E), jnp.float32) * 0.2,
        "wr": jax.random.normal(ks[2], (H, Rsel, E), jnp.float32) * 0.2,
        "Lambda": jax.random.uniform(ks[3], (H, E), jnp.float32),
        "wcw": jax.random.normal(ks[4], (Dh, 2 * E), jnp.float32) * 0.1,
        "bcw": jax.random.normal(ks[5], (Dh,), jnp.float32) * 0.01,
        "wproj": jax.random.normal(ks[6], (dim, dim), jnp.float32) * 0.05,
        "bproj": jax.random.normal(ks[7], (dim,), jnp.float32) * 0.01,
    }


# --------------------------------------------------------------------------------------
# Wrapper
# --------------------------------------------------------------------------------------
def primal_attention_forward(x, params, num_heads, embed_len, low_rank, rank_multi,
                             out_dtype=None):
    B, N, C = x.shape
    H = num_heads
    Dh = C // H
    E = low_rank
    HE = H * E
    HE_pad = _round_up(HE, 128)
    R = low_rank * rank_multi
    bf16 = jnp.bfloat16
    f32 = jnp.float32
    # bf16 output is the recommended setting on v6e/v7x (writeback rivals MXU time);
    # default keeps the module's dtype.
    out_dtype = x.dtype if out_dtype is None else out_dtype

    # ---- gen_weights token subsampling (host-side glue). ----
    # TODO(synk): np.linspace(...).astype(int) can differ by one index from
    # torch.linspace(..., dtype=int) at some (N, R) combinations due to float rounding.
    if embed_len > R:
        idx = np.linspace(0, N - 1, R).astype(np.int32)
        xsel = x[:, idx, :]                                        # (B, R, C)
    else:
        xsel = x                                                   # (B, N, C)

    # ---- parameter-only pre-folds (would be done once at model-load time). ----
    wqk = params["wqk"]                                            # (2C, C), torch (out, in)
    wqk_t = jnp.concatenate([wqk[:C].T, wqk[C:].T], axis=1).astype(bf16)   # (C, 2C)

    head_of_col = np.arange(C) // Dh
    seg_np = (head_of_col[:, None] == np.arange(H)[None, :]).astype(np.float32)
    seg = jnp.asarray(seg_np, dtype=bf16)                          # (C, H) 0/1
    segt = jnp.asarray(np.ascontiguousarray(seg_np.T), dtype=bf16)  # (H, C) 0/1
    blkmask = jnp.asarray(
        (head_of_col[:, None] == (np.arange(HE) // E)[None, :]).astype(np.float32))  # (C, HE)

    # we_cat[r, h*E+e] = we[h, r, e]; same for wr.
    Rsel_p = params["we"].shape[1]
    we_cat = jnp.transpose(params["we"], (1, 0, 2)).reshape(Rsel_p, HE)
    wr_cat = jnp.transpose(params["wr"], (1, 0, 2)).reshape(Rsel_p, HE)

    # ---- per-batch data-dependent low-rank weights, hoisted OUT of the kernel. ----
    # W[b, c, h*E+e] = sum_r xsel[b, r, c] * we[h, r, e] if column c belongs to head h, else 0.
    def pack_w(w_cat):
        w = jnp.einsum("brc,rj->bcj", xsel, w_cat) * blkmask[None]            # (B, C, HE)
        w = jnp.pad(w, ((0, 0), (0, 0), (0, HE_pad - HE)))                    # lane pad
        return w.astype(bf16)

    w_e = pack_w(we_cat)
    w_r = pack_w(wr_cat)

    # concate_weight + output projection folded into one (2*HE_pad, C) matrix + fused bias.
    wcw_t = params["wcw"].T                                        # (2E, Dh)
    wproj_t = params["wproj"].T                                    # (C, C)
    wproj_h = wproj_t.reshape(H, Dh, C)
    p_e = jnp.einsum("ed,hdc->hec", wcw_t[:E], wproj_h).reshape(HE, C)
    p_r = jnp.einsum("ed,hdc->hec", wcw_t[E:], wproj_h).reshape(HE, C)
    pad_rows = ((0, HE_pad - HE), (0, 0))
    p_er = jnp.concatenate([jnp.pad(p_e, pad_rows), jnp.pad(p_r, pad_rows)],
                           axis=0).astype(bf16)                    # (2*HE_pad, C)
    bias_total = (jnp.tile(params["bcw"], H) @ wproj_t
                  + params["bproj"]).reshape(1, C).astype(f32)

    # ---- generation-aware tiling + VMEM budget. ----
    vmem_cap = _vmem_capacity_bytes()
    n_pad, tn, vmem_limit = _plan_tiling(N, C, HE_pad, jnp.dtype(out_dtype).itemsize, vmem_cap)
    nt = n_pad // tn

    x_bf = x.astype(bf16)
    if n_pad != N:
        x_bf = jnp.pad(x_bf, ((0, 0), (0, n_pad - N), (0, 0)))     # zero rows: harmless

    out_shapes = [
        jax.ShapeDtypeStruct((B, n_pad, C), out_dtype),
        jax.ShapeDtypeStruct((B, n_pad, HE_pad), f32),
        jax.ShapeDtypeStruct((B, n_pad, HE_pad), f32),
    ]
    out_specs = [
        pl.BlockSpec((1, tn, C), lambda b, n: (b, n, 0)),
        pl.BlockSpec((1, tn, HE_pad), lambda b, n: (b, n, 0)),
        pl.BlockSpec((1, tn, HE_pad), lambda b, n: (b, n, 0)),
    ]

    def _run(single_buffer_consts):
        def const_spec(shape):
            zero_idx = (0,) * len(shape)
            imap = lambda b, n, _z=zero_idx: _z
            if single_buffer_consts:
                # Constant-index inputs never get re-DMA'd; single-buffer them to save VMEM.
                return pl.BlockSpec(shape, imap, pipeline_mode=pl.Buffered(1))
            return pl.BlockSpec(shape, imap)

        in_specs = [
            pl.BlockSpec((1, tn, C), lambda b, n: (b, n, 0)),       # x tile (bf16)
            const_spec((C, 2 * C)),                                 # wqk^T (fused q|k)
            const_spec((C, H)),                                     # seg
            const_spec((H, C)),                                     # seg^T
            pl.BlockSpec((1, C, HE_pad), lambda b, n: (b, 0, 0)),   # w_e (per batch)
            pl.BlockSpec((1, C, HE_pad), lambda b, n: (b, 0, 0)),   # w_r (per batch)
            const_spec((2 * HE_pad, C)),                            # fused P_ER
            const_spec((1, C)),                                     # fused bias
        ]
        return pl.pallas_call(
            primal_attention_kernel,
            grid=(B, nt),
            in_specs=in_specs,
            out_specs=out_specs,
            out_shape=out_shapes,
            compiler_params=pltpu.CompilerParams(
                dimension_semantics=("parallel", "parallel"),
                vmem_limit_bytes=vmem_limit,
            ),
        )(x_bf, wqk_t, seg, segt, w_e, w_r, p_er, bias_total)

    try:
        out_p, esc_p, rsc_p = _run(True)
    except Exception:
        # pipeline_mode / pl.Buffered(1) not supported by this jax build — retry with the
        # default double-buffered constants (correctness unaffected).
        out_p, esc_p, rsc_p = _run(False)

    # Strip the N / HE padding and restore the module's (B, H, N, E) score views (XLA glue).
    out = out_p[:, :N, :]
    escore = esc_p[:, :N, :HE].reshape(B, N, H, E).transpose(0, 2, 1, 3)
    rscore = rsc_p[:, :N, :HE].reshape(B, N, H, E).transpose(0, 2, 1, 3)

    # Same return structure as the torch module.
    return out, [escore, rscore, params["we"], params["wr"]], params["Lambda"]


# --------------------------------------------------------------------------------------
# Pure-JAX f32 reference (mirrors the torch forward) for correctness checking.
# --------------------------------------------------------------------------------------
def reference_forward(x, params, num_heads, embed_len, low_rank, rank_multi):
    B, N, C = x.shape
    H = num_heads
    Dh = C // H
    R = low_rank * rank_multi

    qk = x @ params["wqk"].T
    qk = qk.reshape(B, N, 2, H, Dh).transpose(2, 0, 3, 1, 4)
    q, k = qk[0], qk[1]                                            # (B,H,N,Dh)

    xt = x.transpose(0, 2, 1).reshape(B, H, Dh, N)
    if embed_len > R:
        idx = np.linspace(0, N - 1, R).astype(np.int32)
        xt = xt[:, :, :, idx]
    xt = xt.transpose(0, 2, 1, 3)                                  # (B,Dh,H,Rsel)
    we = jnp.einsum("bahd,hde->bahe", xt, params["we"]).transpose(0, 2, 1, 3)
    wr = jnp.einsum("bahd,hde->bahe", xt, params["wr"]).transpose(0, 2, 1, 3)

    def fmap(v):
        n = jnp.sqrt(jnp.sum(v * v, axis=-1, keepdims=True))
        return v / jnp.maximum(n, 1e-12)

    q, k = fmap(q), fmap(k)
    escore = jnp.einsum("bhnd,bhde->bhne", q, we)
    rscore = jnp.einsum("bhnd,bhde->bhne", k, wr)
    score = jnp.concatenate([escore, rscore], axis=-1)
    attn = score @ params["wcw"].T + params["bcw"]
    attn = attn.transpose(0, 2, 1, 3).reshape(B, N, C)
    out = attn @ params["wproj"].T + params["bproj"]
    return out, escore, rscore


if __name__ == "__main__":
    key = jax.random.PRNGKey(0)
    kx, kp, kx2, kp2 = jax.random.split(key, 4)

    # Case 1: small shapes; embed_len > low_rank*rank_multi exercises token subsampling.
    B, N, C = 2, 16, 32
    num_heads, low_rank, rank_multi, embed_len = 4, 4, 2, 16
    x = jax.random.normal(kx, (B, N, C), jnp.float32)
    params = make_params(kp, C, num_heads, embed_len, low_rank, rank_multi)

    out, (escore, rscore, _, _), _ = primal_attention_forward(
        x, params, num_heads, embed_len, low_rank, rank_multi)
    jax.block_until_ready(out)
    ref_out, ref_e, ref_r = reference_forward(
        x, params, num_heads, embed_len, low_rank, rank_multi)
    # bf16 MXU operands (f32 accumulation) vs a full-f32 reference -> loose tolerances.
    assert np.allclose(np.asarray(out), np.asarray(ref_out), atol=5e-2, rtol=5e-2)
    assert np.allclose(np.asarray(escore), np.asarray(ref_e), atol=5e-2, rtol=5e-2)
    assert np.allclose(np.asarray(rscore), np.asarray(ref_r), atol=5e-2, rtol=5e-2)

    # Case 2: ViT-like N=197 exercises the pad-N-to-a-128-multiple tiling path.
    B2, N2 = 1, 197
    x2 = jax.random.normal(kx2, (B2, N2, C), jnp.float32)
    params2 = make_params(kp2, C, num_heads, N2, low_rank, rank_multi)
    out2, (e2, r2, _, _), _ = primal_attention_forward(
        x2, params2, num_heads, N2, low_rank, rank_multi)
    jax.block_until_ready(out2)
    ref_out2, ref_e2, ref_r2 = reference_forward(
        x2, params2, num_heads, N2, low_rank, rank_multi)
    assert np.allclose(np.asarray(out2), np.asarray(ref_out2), atol=5e-2, rtol=5e-2)
    assert np.allclose(np.asarray(e2), np.asarray(ref_e2), atol=5e-2, rtol=5e-2)
    assert np.allclose(np.asarray(r2), np.asarray(ref_r2), atol=5e-2, rtol=5e-2)

    print("KERNEL_OK")
</pallas_src>

<mosaic_0001>
module attributes {stable_mosaic.version = 11 : i64} {
  func.func @primal_attention_kernel(%arg0: i32, %arg1: i32, %arg2: memref<1x16x32xbf16, #tpu.memory_space<vmem>>, %arg3: memref<32x64xbf16, #tpu.memory_space<vmem>>, %arg4: memref<32x4xbf16, #tpu.memory_space<vmem>>, %arg5: memref<4x32xbf16, #tpu.memory_space<vmem>>, %arg6: memref<1x32x128xbf16, #tpu.memory_space<vmem>>, %arg7: memref<1x32x128xbf16, #tpu.memory_space<vmem>>, %arg8: memref<256x32xbf16, #tpu.memory_space<vmem>>, %arg9: memref<1x32xf32, #tpu.memory_space<vmem>>, %arg10: memref<1x16x32xf32, #tpu.memory_space<vmem>>, %arg11: memref<1x16x128xf32, #tpu.memory_space<vmem>>, %arg12: memref<1x16x128xf32, #tpu.memory_space<vmem>>) attributes {dimension_semantics = [#tpu.dimension_semantics<parallel>, #tpu.dimension_semantics<parallel>], iteration_bounds = array<i64: 2, 1>, scalar_prefetch = 0 : i64, scratch_operands = 0 : i64, tpu.core_type = #tpu.core_type<tc>, window_params = [{transform_indices = @transform_0, window_bounds = array<i64: 1, 16, 32>}, {pipeline_mode = #tpu.pipeline_mode<synchronous>, transform_indices = @transform_1, window_bounds = array<i64: 32, 64>}, {pipeline_mode = #tpu.pipeline_mode<synchronous>, transform_indices = @transform_2, window_bounds = array<i64: 32, 4>}, {pipeline_mode = #tpu.pipeline_mode<synchronous>, transform_indices = @transform_3, window_bounds = array<i64: 4, 32>}, {transform_indices = @transform_4, window_bounds = array<i64: 1, 32, 128>}, {transform_indices = @transform_5, window_bounds = array<i64: 1, 32, 128>}, {pipeline_mode = #tpu.pipeline_mode<synchronous>, transform_indices = @transform_6, window_bounds = array<i64: 256, 32>}, {pipeline_mode = #tpu.pipeline_mode<synchronous>, transform_indices = @transform_7, window_bounds = array<i64: 1, 32>}, {transform_indices = @transform_8, window_bounds = array<i64: 1, 16, 32>}, {transform_indices = @transform_9, window_bounds = array<i64: 1, 16, 128>}, {transform_indices = @transform_10, window_bounds = array<i64: 1, 16, 128>}]} {
    %c0 = arith.constant 0 : index
    %c0_0 = arith.constant 0 : index
    %c0_1 = arith.constant 0 : index
    %0 = vector.load %arg2[%c0, %c0_0, %c0_1] : memref<1x16x32xbf16, #tpu.memory_space<vmem>>, vector<1x16x32xbf16>
    %1 = vector.shape_cast %0 : vector<1x16x32xbf16> to vector<16x32xbf16>
    %c0_2 = arith.constant 0 : index
    %c0_3 = arith.constant 0 : index
    %2 = vector.load %arg3[%c0_2, %c0_3] : memref<32x64xbf16, #tpu.memory_space<vmem>>, vector<32x64xbf16>
    %cst = arith.constant dense<0.000000e+00> : vector<16x64xf32>
    %3 = tpu.matmul %1, %2, %cst {dimension_numbers = #tpu.dot_dimension_numbers<[1], [0], [0], [1], [0, 0, 1, 1], [], []>} : vector<16x32xbf16>, vector<32x64xbf16>, vector<16x64xf32> -> vector<16x64xf32>
    %4 = vector.extract_strided_slice %3 {offsets = [0, 0], sizes = [16, 32], strides = [1, 1]} : vector<16x64xf32> to vector<16x32xf32>
    %5 = vector.extract_strided_slice %3 {offsets = [0, 32], sizes = [16, 32], strides = [1, 1]} : vector<16x64xf32> to vector<16x32xf32>
    %c0_4 = arith.constant 0 : index
    %c0_5 = arith.constant 0 : index
    %6 = vector.load %arg4[%c0_4, %c0_5] : memref<32x4xbf16, #tpu.memory_space<vmem>>, vector<32x4xbf16>
    %c0_6 = arith.constant 0 : index
    %c0_7 = arith.constant 0 : index
    %7 = vector.load %arg5[%c0_6, %c0_7] : memref<4x32xbf16, #tpu.memory_space<vmem>>, vector<4x32xbf16>
    %8 = arith.mulf %4, %4 : vector<16x32xf32>
    %9 = arith.truncf %8 : vector<16x32xf32> to vector<16x32xbf16>
    %cst_8 = arith.constant dense<0.000000e+00> : vector<16x4xf32>
    %10 = tpu.matmul %9, %6, %cst_8 {dimension_numbers = #tpu.dot_dimension_numbers<[1], [0], [0], [1], [0, 0, 1, 1], [], []>} : vector<16x32xbf16>, vector<32x4xbf16>, vector<16x4xf32> -> vector<16x4xf32>
    %cst_9 = arith.constant 1.000000e-24 : f32
    %11 = vector.broadcast %cst_9 : f32 to vector<16x4xf32>
    %12 = arith.maximumf %10, %11 : vector<16x4xf32>
    %13 = math.rsqrt %12 : vector<16x4xf32>
    %14 = arith.truncf %13 : vector<16x4xf32> to vector<16x4xbf16>
    %cst_10 = arith.constant dense<0.000000e+00> : vector<16x32xf32>
    %15 = tpu.matmul %14, %7, %cst_10 {dimension_numbers = #tpu.dot_dimension_numbers<[1], [0], [0], [1], [0, 0, 1, 1], [], []>} : vector<16x4xbf16>, vector<4x32xbf16>, vector<16x32xf32> -> vector<16x32xf32>
    %16 = arith.mulf %4, %15 : vector<16x32xf32>
    %17 = arith.truncf %16 : vector<16x32xf32> to vector<16x32xbf16>
    %18 = arith.mulf %5, %5 : vector<16x32xf32>
    %19 = arith.truncf %18 : vector<16x32xf32> to vector<16x32xbf16>
    %cst_11 = arith.constant dense<0.000000e+00> : vector<16x4xf32>
    %20 = tpu.matmul %19, %6, %cst_11 {dimension_numbers = #tpu.dot_dimension_numbers<[1], [0], [0], [1], [0, 0, 1, 1], [], []>} : vector<16x32xbf16>, vector<32x4xbf16>, vector<16x4xf32> -> vector<16x4xf32>
    %cst_12 = arith.constant 1.000000e-24 : f32
    %21 = vector.broadcast %cst_12 : f32 to vector<16x4xf32>
    %22 = arith.maximumf %20, %21 : vector<16x4xf32>
    %23 = math.rsqrt %22 : vector<16x4xf32>
    %24 = arith.truncf %23 : vector<16x4xf32> to vector<16x4xbf16>
    %cst_13 = arith.constant dense<0.000000e+00> : vector<16x32xf32>
    %25 = tpu.matmul %24, %7, %cst_13 {dimension_numbers = #tpu.dot_dimension_numbers<[1], [0], [0], [1], [0, 0, 1, 1], [], []>} : vector<16x4xbf16>, vector<4x32xbf16>, vector<16x32xf32> -> vector<16x32xf32>
    %26 = arith.mulf %5, %25 : vector<16x32xf32>
    %27 = arith.truncf %26 : vector<16x32xf32> to vector<16x32xbf16>
    %c0_14 = arith.constant 0 : index
    %c0_15 = arith.constant 0 : index
    %c0_16 = arith.constant 0 : index
    %28 = vector.load %arg6[%c0_14, %c0_15, %c0_16] : memref<1x32x128xbf16, #tpu.memory_space<vmem>>, vector<1x32x128xbf16>
    %29 = vector.shape_cast %28 : vector<1x32x128xbf16> to vector<32x128xbf16>
    %cst_17 = arith.constant dense<0.000000e+00> : vector<16x128xf32>
    %30 = tpu.matmul %17, %29, %cst_17 {dimension_numbers = #tpu.dot_dimension_numbers<[1], [0], [0], [1], [0, 0, 1, 1], [], []>} : vector<16x32xbf16>, vector<32x128xbf16>, vector<16x128xf32> -> vector<16x128xf32>
    %c0_18 = arith.constant 0 : index
    %c0_19 = arith.constant 0 : index
    %c0_20 = arith.constant 0 : index
    %31 = vector.load %arg7[%c0_18, %c0_19, %c0_20] : memref<1x32x128xbf16, #tpu.memory_space<vmem>>, vector<1x32x128xbf16>
    %32 = vector.shape_cast %31 : vector<1x32x128xbf16> to vector<32x128xbf16>
    %cst_21 = arith.constant dense<0.000000e+00> : vector<16x128xf32>
    %33 = tpu.matmul %27, %32, %cst_21 {dimension_numbers = #tpu.dot_dimension_numbers<[1], [0], [0], [1], [0, 0, 1, 1], [], []>} : vector<16x32xbf16>, vector<32x128xbf16>, vector<16x128xf32> -> vector<16x128xf32>
    %c0_22 = arith.constant 0 : index
    %c0_23 = arith.constant 0 : index
    %c0_24 = arith.constant 0 : index
    %34 = vector.load %arg11[%c0_22, %c0_23, %c0_24] : memref<1x16x128xf32, #tpu.memory_space<vmem>>, vector<1x16x128xf32>
    %35 = vector.shape_cast %34 : vector<1x16x128xf32> to vector<16x128xf32>
    %36 = vector.shape_cast %30 : vector<16x128xf32> to vector<1x16x128xf32>
    tpu.vector_store %arg11[%c0_22, %c0_23, %c0_24], %36 {strides = array<i32>} : memref<1x16x128xf32, #tpu.memory_space<vmem>>, vector<1x16x128xf32>,
    %c0_25 = arith.constant 0 : index
    %c0_26 = arith.constant 0 : index
    %c0_27 = arith.constant 0 : index
    %37 = vector.load %arg12[%c0_25, %c0_26, %c0_27] : memref<1x16x128xf32, #tpu.memory_space<vmem>>, vector<1x16x128xf32>
    %38 = vector.shape_cast %37 : vector<1x16x128xf32> to vector<16x128xf32>
    %39 = vector.shape_cast %33 : vector<16x128xf32> to vector<1x16x128xf32>
    tpu.vector_store %arg12[%c0_25, %c0_26, %c0_27], %39 {strides = array<i32>} : memref<1x16x128xf32, #tpu.memory_space<vmem>>, vector<1x16x128xf32>,
    %40 = tpu.concatenate %30, %33 in 1 : vector<16x128xf32>, vector<16x128xf32> -> vector<16x256xf32>
    %41 = arith.truncf %40 : vector<16x256xf32> to vector<16x256xbf16>
    %c0_28 = arith.constant 0 : index
    %c0_29 = arith.constant 0 : index
    %42 = vector.load %arg8[%c0_28, %c0_29] : memref<256x32xbf16, #tpu.memory_space<vmem>>, vector<256x32xbf16>
    %cst_30 = arith.constant dense<0.000000e+00> : vector<16x32xf32>
    %43 = tpu.matmul %41, %42, %cst_30 {dimension_numbers = #tpu.dot_dimension_numbers<[1], [0], [0], [1], [0, 0, 1, 1], [], []>} : vector<16x256xbf16>, vector<256x32xbf16>, vector<16x32xf32> -> vector<16x32xf32>
    %c0_31 = arith.constant 0 : index
    %c0_32 = arith.constant 0 : index
    %44 = vector.load %arg9[%c0_31, %c0_32] : memref<1x32xf32, #tpu.memory_space<vmem>>, vector<1x32xf32>
    %45 = vector.broadcast %44 : vector<1x32xf32> to vector<16x32xf32>
    %46 = arith.addf %43, %45 : vector<16x32xf32>
    %c0_33 = arith.constant 0 : index
    %c0_34 = arith.constant 0 : index
    %c0_35 = arith.constant 0 : index
    %47 = vector.load %arg10[%c0_33, %c0_34, %c0_35] : memref<1x16x32xf32, #tpu.memory_space<vmem>>, vector<1x16x32xf32>
    %48 = vector.shape_cast %47 : vector<1x16x32xf32> to vector<16x32xf32>
    %49 = vector.shape_cast %46 : vector<16x32xf32> to vector<1x16x32xf32>
    tpu.vector_store %arg10[%c0_33, %c0_34, %c0_35], %49 {strides = array<i32>} : memref<1x16x32xf32, #tpu.memory_space<vmem>>, vector<1x16x32xf32>,
    return
  }
  func.func @transform_0(%arg0: i32, %arg1: i32) -> (i32, i32, i32) {
    %c0_i32 = arith.constant 0 : i32
    %c0_i32_0 = arith.constant 0 : i32
    return %arg0, %arg1, %c0_i32 : i32, i32, i32
  }
  func.func @transform_1(%arg0: i32, %arg1: i32) -> (i32, i32) {
    %c0_i32 = arith.constant 0 : i32
    %c0_i32_0 = arith.constant 0 : i32
    %c0_i32_1 = arith.constant 0 : i32
    return %c0_i32, %c0_i32_0 : i32, i32
  }
  func.func @transform_2(%arg0: i32, %arg1: i32) -> (i32, i32) {
    %c0_i32 = arith.constant 0 : i32
    %c0_i32_0 = arith.constant 0 : i32
    %c0_i32_1 = arith.constant 0 : i32
    return %c0_i32, %c0_i32_0 : i32, i32
  }
  func.func @transform_3(%arg0: i32, %arg1: i32) -> (i32, i32) {
    %c0_i32 = arith.constant 0 : i32
    %c0_i32_0 = arith.constant 0 : i32
    %c0_i32_1 = arith.constant 0 : i32
    return %c0_i32, %c0_i32_0 : i32, i32
  }
  func.func @transform_4(%arg0: i32, %arg1: i32) -> (i32, i32, i32) {
    %c0_i32 = arith.constant 0 : i32
    %c0_i32_0 = arith.constant 0 : i32
    %c0_i32_1 = arith.constant 0 : i32
    return %arg0, %c0_i32, %c0_i32_0 : i32, i32, i32
  }
  func.func @transform_5(%arg0: i32, %arg1: i32) -> (i32, i32, i32) {
    %c0_i32 = arith.constant 0 : i32
    %c0_i32_0 = arith.constant 0 : i32
    %c0_i32_1 = arith.constant 0 : i32
    return %arg0, %c0_i32, %c0_i32_0 : i32, i32, i32
  }
  func.func @transform_6(%arg0: i32, %arg1: i32) -> (i32, i32) {
    %c0_i32 = arith.constant 0 : i32
    %c0_i32_0 = arith.constant 0 : i32
    %c0_i32_1 = arith.constant 0 : i32
    return %c0_i32, %c0_i32_0 : i32, i32
  }
  func.func @transform_7(%arg0: i32, %arg1: i32) -> (i32, i32) {
    %c0_i32 = arith.constant 0 : i32
    %c0_i32_0 = arith.constant 0 : i32
    %c0_i32_1 = arith.constant 0 : i32
    return %c0_i32, %c0_i32_0 : i32, i32
  }
  func.func @transform_8(%arg0: i32, %arg1: i32) -> (i32, i32, i32) {
    %c0_i32 = arith.constant 0 : i32
    %c0_i32_0 = arith.constant 0 : i32
    return %arg0, %arg1, %c0_i32 : i32, i32, i32
  }
  func.func @transform_9(%arg0: i32, %arg1: i32) -> (i32, i32, i32) {
    %c0_i32 = arith.constant 0 : i32
    %c0_i32_0 = arith.constant 0 : i32
    return %arg0, %arg1, %c0_i32 : i32, i32, i32
  }
  func.func @transform_10(%arg0: i32, %arg1: i32) -> (i32, i32, i32) {
    %c0_i32 = arith.constant 0 : i32
    %c0_i32_0 = arith.constant 0 : i32
    return %arg0, %arg1, %c0_i32 : i32, i32, i32
  }
}

module attributes {stable_mosaic.version = 11 : i64} {
  func.func @primal_attention_kernel(%arg0: i32, %arg1: i32, %arg2: memref<1x16x32xbf16, #tpu.memory_space<vmem>>, %arg3: memref<32x64xbf16, #tpu.memory_space<vmem>>, %arg4: memref<32x4xbf16, #tpu.memory_space<vmem>>, %arg5: memref<4x32xbf16, #tpu.memory_space<vmem>>, %arg6: memref<1x32x128xbf16, #tpu.memory_space<vmem>>, %arg7: memref<1x32x128xbf16, #tpu.memory_space<vmem>>, %arg8: memref<256x32xbf16, #tpu.memory_space<vmem>>, %arg9: memref<1x32xf32, #tpu.memory_space<vmem>>, %arg10: memref<1x16x32xf32, #tpu.memory_space<vmem>>, %arg11: memref<1x16x128xf32, #tpu.memory_space<vmem>>, %arg12: memref<1x16x128xf32, #tpu.memory_space<vmem>>) attributes {dimension_semantics = [#tpu.dimension_semantics<parallel>, #tpu.dimension_semantics<parallel>], iteration_bounds = array<i64: 2, 1>, scalar_prefetch = 0 : i64, scratch_operands = 0 : i64, tpu.core_type = #tpu.core_type<tc>, window_params = [{transform_indices = @transform_0, window_bounds = array<i64: 1, 16, 32>}, {pipeline_mode = #tpu.pipeline_mode<synchronous>, transform_indices = @transform_1, window_bounds = array<i64: 32, 64>}, {pipeline_mode = #tpu.pipeline_mode<synchronous>, transform_indices = @transform_2, window_bounds = array<i64: 32, 4>}, {pipeline_mode = #tpu.pipeline_mode<synchronous>, transform_indices = @transform_3, window_bounds = array<i64: 4, 32>}, {transform_indices = @transform_4, window_bounds = array<i64: 1, 32, 128>}, {transform_indices = @transform_5, window_bounds = array<i64: 1, 32, 128>}, {pipeline_mode = #tpu.pipeline_mode<synchronous>, transform_indices = @transform_6, window_bounds = array<i64: 256, 32>}, {pipeline_mode = #tpu.pipeline_mode<synchronous>, transform_indices = @transform_7, window_bounds = array<i64: 1, 32>}, {transform_indices = @transform_8, window_bounds = array<i64: 1, 16, 32>}, {transform_indices = @transform_9, window_bounds = array<i64: 1, 16, 128>}, {transform_indices = @transform_10, window_bounds = array<i64: 1, 16, 128>}]} {
    %c0 = arith.constant 0 : index
    %c0_0 = arith.constant 0 : index
    %c0_1 = arith.constant 0 : index
    %0 = vector.load %arg2[%c0, %c0_0, %c0_1] : memref<1x16x32xbf16, #tpu.memory_space<vmem>>, vector<1x16x32xbf16>
    %1 = vector.shape_cast %0 : vector<1x16x32xbf16> to vector<16x32xbf16>
    %c0_2 = arith.constant 0 : index
    %c0_3 = arith.constant 0 : index
    %2 = vector.load %arg3[%c0_2, %c0_3] : memref<32x64xbf16, #tpu.memory_space<vmem>>, vector<32x64xbf16>
    %cst = arith.constant dense<0.000000e+00> : vector<16x64xf32>
    %3 = tpu.matmul %1, %2, %cst {dimension_numbers = #tpu.dot_dimension_numbers<[1], [0], [0], [1], [0, 0, 1, 1], [], []>} : vector<16x32xbf16>, vector<32x64xbf16>, vector<16x64xf32> -> vector<16x64xf32>
    %4 = vector.extract_strided_slice %3 {offsets = [0, 0], sizes = [16, 32], strides = [1, 1]} : vector<16x64xf32> to vector<16x32xf32>
    %5 = vector.extract_strided_slice %3 {offsets = [0, 32], sizes = [16, 32], strides = [1, 1]} : vector<16x64xf32> to vector<16x32xf32>
    %c0_4 = arith.constant 0 : index
    %c0_5 = arith.constant 0 : index
    %6 = vector.load %arg4[%c0_4, %c0_5] : memref<32x4xbf16, #tpu.memory_space<vmem>>, vector<32x4xbf16>
    %c0_6 = arith.constant 0 : index
    %c0_7 = arith.constant 0 : index
    %7 = vector.load %arg5[%c0_6, %c0_7] : memref<4x32xbf16, #tpu.memory_space<vmem>>, vector<4x32xbf16>
    %8 = arith.mulf %4, %4 : vector<16x32xf32>
    %9 = arith.truncf %8 : vector<16x32xf32> to vector<16x32xbf16>
    %cst_8 = arith.constant dense<0.000000e+00> : vector<16x4xf32>
    %10 = tpu.matmul %9, %6, %cst_8 {dimension_numbers = #tpu.dot_dimension_numbers<[1], [0], [0], [1], [0, 0, 1, 1], [], []>} : vector<16x32xbf16>, vector<32x4xbf16>, vector<16x4xf32> -> vector<16x4xf32>
    %cst_9 = arith.constant 1.000000e-24 : f32
    %11 = vector.broadcast %cst_9 : f32 to vector<16x4xf32>
    %12 = arith.maximumf %10, %11 : vector<16x4xf32>
    %13 = math.rsqrt %12 : vector<16x4xf32>
    %14 = arith.truncf %13 : vector<16x4xf32> to vector<16x4xbf16>
    %cst_10 = arith.constant dense<0.000000e+00> : vector<16x32xf32>
    %15 = tpu.matmul %14, %7, %cst_10 {dimension_numbers = #tpu.dot_dimension_numbers<[1], [0], [0], [1], [0, 0, 1, 1], [], []>} : vector<16x4xbf16>, vector<4x32xbf16>, vector<16x32xf32> -> vector<16x32xf32>
    %16 = arith.mulf %4, %15 : vector<16x32xf32>
    %17 = arith.truncf %16 : vector<16x32xf32> to vector<16x32xbf16>
    %18 = arith.mulf %5, %5 : vector<16x32xf32>
    %19 = arith.truncf %18 : vector<16x32xf32> to vector<16x32xbf16>
    %cst_11 = arith.constant dense<0.000000e+00> : vector<16x4xf32>
    %20 = tpu.matmul %19, %6, %cst_11 {dimension_numbers = #tpu.dot_dimension_numbers<[1], [0], [0], [1], [0, 0, 1, 1], [], []>} : vector<16x32xbf16>, vector<32x4xbf16>, vector<16x4xf32> -> vector<16x4xf32>
    %cst_12 = arith.constant 1.000000e-24 : f32
    %21 = vector.broadcast %cst_12 : f32 to vector<16x4xf32>
    %22 = arith.maximumf %20, %21 : vector<16x4xf32>
    %23 = math.rsqrt %22 : vector<16x4xf32>
    %24 = arith.truncf %23 : vector<16x4xf32> to vector<16x4xbf16>
    %cst_13 = arith.constant dense<0.000000e+00> : vector<16x32xf32>
    %25 = tpu.matmul %24, %7, %cst_13 {dimension_numbers = #tpu.dot_dimension_numbers<[1], [0], [0], [1], [0, 0, 1, 1], [], []>} : vector<16x4xbf16>, vector<4x32xbf16>, vector<16x32xf32> -> vector<16x32xf32>
    %26 = arith.mulf %5, %25 : vector<16x32xf32>
    %27 = arith.truncf %26 : vector<16x32xf32> to vector<16x32xbf16>
    %c0_14 = arith.constant 0 : index
    %c0_15 = arith.constant 0 : index
    %c0_16 = arith.constant 0 : index
    %28 = vector.load %arg6[%c0_14, %c0_15, %c0_16] : memref<1x32x128xbf16, #tpu.memory_space<vmem>>, vector<1x32x128xbf16>
    %29 = vector.shape_cast %28 : vector<1x32x128xbf16> to vector<32x128xbf16>
    %cst_17 = arith.constant dense<0.000000e+00> : vector<16x128xf32>
    %30 = tpu.matmul %17, %29, %cst_17 {dimension_numbers = #tpu.dot_dimension_numbers<[1], [0], [0], [1], [0, 0, 1, 1], [], []>} : vector<16x32xbf16>, vector<32x128xbf16>, vector<16x128xf32> -> vector<16x128xf32>
    %c0_18 = arith.constant 0 : index
    %c0_19 = arith.constant 0 : index
    %c0_20 = arith.constant 0 : index
    %31 = vector.load %arg7[%c0_18, %c0_19, %c0_20] : memref<1x32x128xbf16, #tpu.memory_space<vmem>>, vector<1x32x128xbf16>
    %32 = vector.shape_cast %31 : vector<1x32x128xbf16> to vector<32x128xbf16>
    %cst_21 = arith.constant dense<0.000000e+00> : vector<16x128xf32>
    %33 = tpu.matmul %27, %32, %cst_21 {dimension_numbers = #tpu.dot_dimension_numbers<[1], [0], [0], [1], [0, 0, 1, 1], [], []>} : vector<16x32xbf16>, vector<32x128xbf16>, vector<16x128xf32> -> vector<16x128xf32>
    %c0_22 = arith.constant 0 : index
    %c0_23 = arith.constant 0 : index
    %c0_24 = arith.constant 0 : index
    %34 = vector.load %arg11[%c0_22, %c0_23, %c0_24] : memref<1x16x128xf32, #tpu.memory_space<vmem>>, vector<1x16x128xf32>
    %35 = vector.shape_cast %34 : vector<1x16x128xf32> to vector<16x128xf32>
    %36 = vector.shape_cast %30 : vector<16x128xf32> to vector<1x16x128xf32>
    tpu.vector_store %arg11[%c0_22, %c0_23, %c0_24], %36 {strides = array<i32>} : memref<1x16x128xf32, #tpu.memory_space<vmem>>, vector<1x16x128xf32>,
    %c0_25 = arith.constant 0 : index
    %c0_26 = arith.constant 0 : index
    %c0_27 = arith.constant 0 : index
    %37 = vector.load %arg12[%c0_25, %c0_26, %c0_27] : memref<1x16x128xf32, #tpu.memory_space<vmem>>, vector<1x16x128xf32>
    %38 = vector.shape_cast %37 : vector<1x16x128xf32> to vector<16x128xf32>
    %39 = vector.shape_cast %33 : vector<16x128xf32> to vector<1x16x128xf32>
    tpu.vector_store %arg12[%c0_25, %c0_26, %c0_27], %39 {strides = array<i32>} : memref<1x16x128xf32, #tpu.memory_space<vmem>>, vector<1x16x128xf32>,
    %40 = tpu.concatenate %30, %33 in 1 : vector<16x128xf32>, vector<16x128xf32> -> vector<16x256xf32>
    %41 = arith.truncf %40 : vector<16x256xf32> to vector<16x256xbf16>
    %c0_28 = arith.constant 0 : index
    %c0_29 = arith.constant 0 : index
    %42 = vector.load %arg8[%c0_28, %c0_29] : memref<256x32xbf16, #tpu.memory_space<vmem>>, vector<256x32xbf16>
    %cst_30 = arith.constant dense<0.000000e+00> : vector<16x32xf32>
    %43 = tpu.matmul %41, %42, %cst_30 {dimension_numbers = #tpu.dot_dimension_numbers<[1], [0], [0], [1], [0, 0, 1, 1], [], []>} : vector<16x256xbf16>, vector<256x32xbf16>, vector<16x32xf32> -> vector<16x32xf32>
    %c0_31 = arith.constant 0 : index
    %c0_32 = arith.constant 0 : index
    %44 = vector.load %arg9[%c0_31, %c0_32] : memref<1x32xf32, #tpu.memory_space<vmem>>, vector<1x32xf32>
    %45 = vector.broadcast %44 : vector<1x32xf32> to vector<16x32xf32>
    %46 = arith.addf %43, %45 : vector<16x32xf32>
    %c0_33 = arith.constant 0 : index
    %c0_34 = arith.constant 0 : index
    %c0_35 = arith.constant 0 : index
    %47 = vector.load %arg10[%c0_33, %c0_34, %c0_35] : memref<1x16x32xf32, #tpu.memory_space<vmem>>, vector<1x16x32xf32>
    %48 = vector.shape_cast %47 : vector<1x16x32xf32> to vector<16x32xf32>
    %49 = vector.shape_cast %46 : vector<16x32xf32> to vector<1x16x32xf32>
    tpu.vector_store %arg10[%c0_33, %c0_34, %c0_35], %49 {strides = array<i32>} : memref<1x16x32xf32, #tpu.memory_space<vmem>>, vector<1x16x32xf32>,
    return
  }
  func.func @transform_0(%arg0: i32, %arg1: i32) -> (i32, i32, i32) {
    %c0_i32 = arith.constant 0 : i32
    %c0_i32_0 = arith.constant 0 : i32
    return %arg0, %arg1, %c0_i32 : i32, i32, i32
  }
  func.func @transform_1(%arg0: i32, %arg1: i32) -> (i32, i32) {
    %c0_i32 = arith.constant 0 : i32
    %c0_i32_0 = arith.constant 0 : i32
    %c0_i32_1 = arith.constant 0 : i32
    return %c0_i32, %c0_i32_0 : i32, i32
  }
  func.func @transform_2(%arg0: i32, %arg1: i32) -> (i32, i32) {
    %c0_i32 = arith.constant 0 : i32
    %c0_i32_0 = arith.constant 0 : i32
    %c0_i32_1 = arith.constant 0 : i32
    return %c0_i32, %c0_i32_0 : i32, i32
  }
  func.func @transform_3(%arg0: i32, %arg1: i32) -> (i32, i32) {
    %c0_i32 = arith.constant 0 : i32
    %c0_i32_0 = arith.constant 0 : i32
    %c0_i32_1 = arith.constant 0 : i32
    return %c0_i32, %c0_i32_0 : i32, i32
  }
  func.func @transform_4(%arg0: i32, %arg1: i32) -> (i32, i32, i32) {
    %c0_i32 = arith.constant 0 : i32
    %c0_i32_0 = arith.constant 0 : i32
    %c0_i32_1 = arith.constant 0 : i32
    return %arg0, %c0_i32, %c0_i32_0 : i32, i32, i32
  }
  func.func @transform_5(%arg0: i32, %arg1: i32) -> (i32, i32, i32) {
    %c0_i32 = arith.constant 0 : i32
    %c0_i32_0 = arith.constant 0 : i32
    %c0_i32_1 = arith.constant 0 : i32
    return %arg0, %c0_i32, %c0_i32_0 : i32, i32, i32
  }
  func.func @transform_6(%arg0: i32, %arg1: i32) -> (i32, i32) {
    %c0_i32 = arith.constant 0 : i32
    %c0_i32_0 = arith.constant 0 : i32
    %c0_i32_1 = arith.constant 0 : i32
    return %c0_i32, %c0_i32_0 : i32, i32
  }
  func.func @transform_7(%arg0: i32, %arg1: i32) -> (i32, i32) {
    %c0_i32 = arith.constant 0 : i32
    %c0_i32_0 = arith.constant 0 : i32
    %c0_i32_1 = arith.constant 0 : i32
    return %c0_i32, %c0_i32_0 : i32, i32
  }
  func.func @transform_8(%arg0: i32, %arg1: i32) -> (i32, i32, i32) {
    %c0_i32 = arith.constant 0 : i32
    %c0_i32_0 = arith.constant 0 : i32
    return %arg0, %arg1, %c0_i32 : i32, i32, i32
  }
  func.func @transform_9(%arg0: i32, %arg1: i32) -> (i32, i32, i32) {
    %c0_i32 = arith.constant 0 : i32
    %c0_i32_0 = arith.constant 0 : i32
    return %arg0, %arg1, %c0_i32 : i32, i32, i32
  }
  func.func @transform_10(%arg0: i32, %arg1: i32) -> (i32, i32, i32) {
    %c0_i32 = arith.constant 0 : i32
    %c0_i32_0 = arith.constant 0 : i32
    return %arg0, %arg1, %c0_i32 : i32, i32, i32
  }
}

</mosaic_0001>

<llo_original>
// kernel: tpu_custom_call.1
$region0: #{tpu_custom_call.1}
  #allocation0 [shape = 'u32[]', space=smem, size = 0x4, offset = 0x4, fixed_abs, tag = 'smem constant byte address 0x4 - core index']
  #allocation1 [shape = 'u32[144,128]{1,0:T(1,128)}', space=vmem, size = 0x12000, scoped, tag = 'internal scratch']
  %s0 = inlined_call_operand.vmem [shape: bf16[2,16,32], index: 0, kind: input, shape index: {}]
  %s1 = inlined_call_operand.vmem [shape: bf16[32,64], index: 1, kind: input, shape index: {}]
  %s2 = inlined_call_operand.vmem [shape: bf16[32,4], index: 2, kind: input, shape index: {}]
  %s3 = inlined_call_operand.vmem [shape: bf16[4,32], index: 3, kind: input, shape index: {}]
  %s4 = inlined_call_operand.vmem [shape: bf16[2,32,128], index: 4, kind: input, shape index: {}]
  %s5 = inlined_call_operand.vmem [shape: bf16[2,32,128], index: 5, kind: input, shape index: {}]
  %s6 = inlined_call_operand.vmem [shape: bf16[256,32], index: 6, kind: input, shape index: {}]
  %s7 = inlined_call_operand.vmem [shape: f32[1,32], index: 7, kind: input, shape index: {}]
  %s8 = inlined_call_operand.hbm [shape: f32[2,16,32], index: 8, kind: output, shape index: {0}]
  %s9 = inlined_call_operand.hbm [shape: f32[2,16,128], index: 9, kind: output, shape index: {1}]
  %s10 = inlined_call_operand.hbm [shape: f32[2,16,128], index: 10, kind: output, shape index: {2}]
  %11 = xla_tuple %s8, %s9, %s10
  %s12 = sld [smem:[#allocation0]]
  $region81: #{tpu_custom_call.1} parent=0
    _
  %s14 = ssub.s32 1, %s12
  %s15 = scalar_select 0, %s14, %s12
  $region1: #{tpu_custom_call.1} parent=0
    #allocation2 [shape = 'u8[16384]{0}', space=vmem, size = 0x4000, scoped, tag = 'output window, operand 0']
    #allocation3 [shape = 's32[2]{0}', space=sflag, size = 0x8, scoped, tag = 'scoped memory for tpu_custom_call.1']
    #allocation4 [shape = 'u8[16384]{0}', space=vmem, size = 0x4000, scoped, tag = 'output window, operand 1']
    #allocation5 [shape = 's32[2]{0}', space=sflag, size = 0x8, scoped, tag = 'scoped memory for tpu_custom_call.1']
    #allocation6 [shape = 'u8[16384]{0}', space=vmem, size = 0x4000, scoped, tag = 'output window, operand 2']
    %16 = vsyncpa [#allocation3], 0
    %s17 = scalar_lea.sflag [#allocation3], 1
    %18 = vsyncpa %s17, 0
    %19 = vsyncpa [#allocation5], 0
    %s20 = scalar_lea.sflag [#allocation5], 1
    %21 = vsyncpa %s20, 0
    loop: start=0, step=1, limit=4
    $region2: #{tpu_custom_call.1} parent=1 // loop_pre_header
      _
    $region3: #{tpu_custom_call.1} parent=1 // loop_header
      %s23 = sphi 0, %s27
      %p24 = scmp.ge.s32.totalorder %s23, 4
      %s30 = sphi 0, %s42
      %s31 = sphi 0, %s38
      %s32 = sphi 0, %s30
      %s33 = sphi 0, %s31
      %s34 = sphi 0, %s32
      %s35 = sphi 0, %s33
      %s47 = sphi 0, %s49
      %s50 = sphi 0, %s47
      %s51 = sphi 0, %s50
      %s67 = sphi 0, %s51
      %s71 = sphi 0, %s71
      %s73 = sphi 0, %s71
      %s74 = sphi 0, %s73
      %s88 = sphi 0, %s74
      %s92 = sphi 0, %s92
      %s94 = sphi 0, %s92
      %s95 = sphi 0, %s94
      %s109 = sphi 0, %s95
      %s113 = sphi 0, %s113
      %s115 = sphi 0, %s113
      %s116 = sphi 0, %s115
      %s130 = sphi 0, %s116
      %s136 = sphi 0, %s138
      %s139 = sphi 0, %s136
      %s140 = sphi 0, %s139
      %s156 = sphi 0, %s140
      %s162 = sphi 0, %s164
      %s165 = sphi 0, %s162
      %s166 = sphi 0, %s165
      %s182 = sphi 0, %s166
      %s186 = sphi 0, %s186
      %s188 = sphi 0, %s186
      %s189 = sphi 0, %s188
      %s203 = sphi 0, %s189
      %s207 = sphi 0, %s207
      %s209 = sphi 0, %s207
      %s210 = sphi 0, %s209
      %s224 = sphi 0, %s210
      %s232 = sphi 0, %s234
      %s235 = sphi 0, %s232
      %s236 = sphi 0, %s235
      %s252 = sphi 0, %s236
      %s260 = sphi 0, %s262
      %s263 = sphi 0, %s260
      %s264 = sphi 0, %s263
      %s280 = sphi 0, %s264
      %s288 = sphi 0, %s290
      %s291 = sphi 0, %s288
      %s292 = sphi 0, %s291
      %s308 = sphi 0, %s292
    $region4: #{tpu_custom_call.1} parent=1 // loop_header_branch
      %26 = sbr.rel (%p24) target = $region8
    $region5: #{tpu_custom_call.1} parent=1 // loop_body
      %s28 = ssub.s32 %s23, 1
      %s29 = ssub.s32 %s23, 2
      %s36 = sadd.s32 1, %s31
      %p37 = scmp.ge.s32.totalorder %s36, 1
      %s38 = scalar_select %p37, 0, %s36
      %s39 = sadd.s32 1, %s30
      %s40 = scalar_select %p37, %s39, %s30
      %p41 = scmp.ge.s32.totalorder %s40, 2
      %s42 = scalar_select %p41, 0, %s40
      %s43 = ssub.s32 %s30, %s42
      %s44 = ssub.s32 %s31, %s38
      %s45 = sor.u32 %s43, %s44
      %p46 = scmp.eq.s32.totalorder %s45, 0
      %s48 = sadd.s32 %s47, 1
      %s49 = scalar_select %p46, %s47, %s48
      %p52 = pneg %p46
      %p53 = scmp.eq.s32.totalorder %s23, 1
      %p54 = por %p52, %p53
      %p55 = scmp.ne.s32.totalorder %s47, %s50
      %p56 = scmp.eq.s32.totalorder %s23, 0
      %p57 = por %p55, %p56
      %p58 = scmp.ne.s32.totalorder %s47, %s50
      %p59 = scmp.eq.s32.totalorder %s28, 1
      %p60 = por %p58, %p59
      %p61 = scmp.ne.s32.totalorder %s50, %s51
      %p62 = scmp.eq.s32.totalorder %s28, 0
      %p63 = por %p61, %p62
      %p64 = scmp.ne.s32.totalorder %s50, %s51
      %p65 = scmp.eq.s32.totalorder %s29, 1
      %p66 = por %p64, %p65
      %p68 = scmp.ne.s32.totalorder %s51, %s67
      %p69 = scmp.eq.s32.totalorder %s29, 0
      %p70 = por %p68, %p69
      %s72 = sadd.s32 %s71, 1
      %p75 = scmp.eq.s32.totalorder %s23, 1
      %p76 = scmp.ne.s32.totalorder %s71, %s73
      %p77 = scmp.eq.s32.totalorder %s23, 0
      %p78 = por %p76, %p77
      %p79 = scmp.ne.s32.totalorder %s71, %s73
      %p80 = scmp.eq.s32.totalorder %s28, 1
      %p81 = por %p79, %p80
      %p82 = scmp.ne.s32.totalorder %s73, %s74
      %p83 = scmp.eq.s32.totalorder %s28, 0
      %p84 = por %p82, %p83
      %p85 = scmp.ne.s32.totalorder %s73, %s74
      %p86 = scmp.eq.s32.totalorder %s29, 1
      %p87 = por %p85, %p86
      %p89 = scmp.ne.s32.totalorder %s74, %s88
      %p90 = scmp.eq.s32.totalorder %s29, 0
      %p91 = por %p89, %p90
      %s93 = sadd.s32 %s92, 1
      %p96 = scmp.eq.s32.totalorder %s23, 1
      %p97 = scmp.ne.s32.totalorder %s92, %s94
      %p98 = scmp.eq.s32.totalorder %s23, 0
      %p99 = por %p97, %p98
      %p100 = scmp.ne.s32.totalorder %s92, %s94
      %p101 = scmp.eq.s32.totalorder %s28, 1
      %p102 = por %p100, %p101
      %p103 = scmp.ne.s32.totalorder %s94, %s95
      %p104 = scmp.eq.s32.totalorder %s28, 0
      %p105 = por %p103, %p104
      %p106 = scmp.ne.s32.totalorder %s94, %s95
      %p107 = scmp.eq.s32.totalorder %s29, 1
      %p108 = por %p106, %p107
      %p110 = scmp.ne.s32.totalorder %s95, %s109
      %p111 = scmp.eq.s32.totalorder %s29, 0
      %p112 = por %p110, %p111
      %s114 = sadd.s32 %s113, 1
      %p117 = scmp.eq.s32.totalorder %s23, 1
      %p118 = scmp.ne.s32.totalorder %s113, %s115
      %p119 = scmp.eq.s32.totalorder %s23, 0
      %p120 = por %p118, %p119
      %p121 = scmp.ne.s32.totalorder %s113, %s115
      %p122 = scmp.eq.s32.totalorder %s28, 1
      %p123 = por %p121, %p122
      %p124 = scmp.ne.s32.totalorder %s115, %s116
      %p125 = scmp.eq.s32.totalorder %s28, 0
      %p126 = por %p124, %p125
      %p127 = scmp.ne.s32.totalorder %s115, %s116
      %p128 = scmp.eq.s32.totalorder %s29, 1
      %p129 = por %p127, %p128
      %p131 = scmp.ne.s32.totalorder %s116, %s130
      %p132 = scmp.eq.s32.totalorder %s29, 0
      %p133 = por %p131, %p132
      %s134 = ssub.s32 %s30, %s42
      %p135 = scmp.eq.s32.totalorder %s134, 0
      %s137 = sadd.s32 %s136, 1
      %s138 = scalar_select %p135, %s136, %s137
      %p141 = pneg %p135
      %p142 = scmp.eq.s32.totalorder %s23, 1
      %p143 = por %p141, %p142
      %p144 = scmp.ne.s32.totalorder %s136, %s139
      %p145 = scmp.eq.s32.totalorder %s23, 0
      %p146 = por %p144, %p145
      %p147 = scmp.ne.s32.totalorder %s136, %s139
      %p148 = scmp.eq.s32.totalorder %s28, 1
      %p149 = por %p147, %p148
      %p150 = scmp.ne.s32.totalorder %s139, %s140
      %p151 = scmp.eq.s32.totalorder %s28, 0
      %p152 = por %p150, %p151
      %p153 = scmp.ne.s32.totalorder %s139, %s140
      %p154 = scmp.eq.s32.totalorder %s29, 1
      %p155 = por %p153, %p154
      %p157 = scmp.ne.s32.totalorder %s140, %s156
      %p158 = scmp.eq.s32.totalorder %s29, 0
      %p159 = por %p157, %p158
      %s160 = ssub.s32 %s30, %s42
      %p161 = scmp.eq.s32.totalorder %s160, 0
      %s163 = sadd.s32 %s162, 1
      %s164 = scalar_select %p161, %s162, %s163
      %p167 = pneg %p161
      %p168 = scmp.eq.s32.totalorder %s23, 1
      %p169 = por %p167, %p168
      %p170 = scmp.ne.s32.totalorder %s162, %s165
      %p171 = scmp.eq.s32.totalorder %s23, 0
      %p172 = por %p170, %p171
      %p173 = scmp.ne.s32.totalorder %s162, %s165
      %p174 = scmp.eq.s32.totalorder %s28, 1
      %p175 = por %p173, %p174
      %p176 = scmp.ne.s32.totalorder %s165, %s166
      %p177 = scmp.eq.s32.totalorder %s28, 0
      %p178 = por %p176, %p177
      %p179 = scmp.ne.s32.totalorder %s165, %s166
      %p180 = scmp.eq.s32.totalorder %s29, 1
      %p181 = por %p179, %p180
      %p183 = scmp.ne.s32.totalorder %s166, %s182
      %p184 = scmp.eq.s32.totalorder %s29, 0
      %p185 = por %p183, %p184
      %s187 = sadd.s32 %s186, 1
      %p190 = scmp.eq.s32.totalorder %s23, 1
      %p191 = scmp.ne.s32.totalorder %s186, %s188
      %p192 = scmp.eq.s32.totalorder %s23, 0
      %p193 = por %p191, %p192
      %p194 = scmp.ne.s32.totalorder %s186, %s188
      %p195 = scmp.eq.s32.totalorder %s28, 1
      %p196 = por %p194, %p195
      %p197 = scmp.ne.s32.totalorder %s188, %s189
      %p198 = scmp.eq.s32.totalorder %s28, 0
      %p199 = por %p197, %p198
      %p200 = scmp.ne.s32.totalorder %s188, %s189
      %p201 = scmp.eq.s32.totalorder %s29, 1
      %p202 = por %p200, %p201
      %p204 = scmp.ne.s32.totalorder %s189, %s203
      %p205 = scmp.eq.s32.totalorder %s29, 0
      %p206 = por %p204, %p205
      %s208 = sadd.s32 %s207, 1
      %p211 = scmp.eq.s32.totalorder %s23, 1
      %p212 = scmp.ne.s32.totalorder %s207, %s209
      %p213 = scmp.eq.s32.totalorder %s23, 0
      %p214 = por %p212, %p213
      %p215 = scmp.ne.s32.totalorder %s207, %s209
      %p216 = scmp.eq.s32.totalorder %s28, 1
      %p217 = por %p215, %p216
      %p218 = scmp.ne.s32.totalorder %s209, %s210
      %p219 = scmp.eq.s32.totalorder %s28, 0
      %p220 = por %p218, %p219
      %p221 = scmp.ne.s32.totalorder %s209, %s210
      %p222 = scmp.eq.s32.totalorder %s29, 1
      %p223 = por %p221, %p222
      %p225 = scmp.ne.s32.totalorder %s210, %s224
      %p226 = scmp.eq.s32.totalorder %s29, 0
      %p227 = por %p225, %p226
      %s228 = ssub.s32 %s30, %s42
      %s229 = ssub.s32 %s31, %s38
      %s230 = sor.u32 %s228, %s229
      %p231 = scmp.eq.s32.totalorder %s230, 0
      %s233 = sadd.s32 %s232, 1
      %s234 = scalar_select %p231, %s232, %s233
      %p237 = pneg %p231
      %p238 = scmp.eq.s32.totalorder %s23, 1
      %p239 = por %p237, %p238
      %p240 = scmp.ne.s32.totalorder %s232, %s235
      %p241 = scmp.eq.s32.totalorder %s23, 0
      %p242 = por %p240, %p241
      %p243 = scmp.ne.s32.totalorder %s232, %s235
      %p244 = scmp.eq.s32.totalorder %s28, 1
      %p245 = por %p243, %p244
      %p246 = scmp.ne.s32.totalorder %s235, %s236
      %p247 = scmp.eq.s32.totalorder %s28, 0
      %p248 = por %p246, %p247
      %p249 = scmp.ne.s32.totalorder %s235, %s236
      %p250 = scmp.eq.s32.totalorder %s29, 1
      %p251 = por %p249, %p250
      %p253 = scmp.ne.s32.totalorder %s236, %s252
      %p254 = scmp.eq.s32.totalorder %s29, 0
      %p255 = por %p253, %p254
      %s256 = ssub.s32 %s30, %s42
      %s257 = ssub.s32 %s31, %s38
      %s258 = sor.u32 %s256, %s257
      %p259 = scmp.eq.s32.totalorder %s258, 0
      %s261 = sadd.s32 %s260, 1
      %s262 = scalar_select %p259, %s260, %s261
      %p265 = pneg %p259
      %p266 = scmp.eq.s32.totalorder %s23, 1
      %p267 = por %p265, %p266
      %p268 = scmp.ne.s32.totalorder %s260, %s263
      %p269 = scmp.eq.s32.totalorder %s23, 0
      %p270 = por %p268, %p269
      %p271 = scmp.ne.s32.totalorder %s260, %s263
      %p272 = scmp.eq.s32.totalorder %s28, 1
      %p273 = por %p271, %p272
      %p274 = scmp.ne.s32.totalorder %s263, %s264
      %p275 = scmp.eq.s32.totalorder %s28, 0
      %p276 = por %p274, %p275
      %p277 = scmp.ne.s32.totalorder %s263, %s264
      %p278 = scmp.eq.s32.totalorder %s29, 1
      %p279 = por %p277, %p278
      %p281 = scmp.ne.s32.totalorder %s264, %s280
      %p282 = scmp.eq.s32.totalorder %s29, 0
      %p283 = por %p281, %p282
      %s284 = ssub.s32 %s30, %s42
      %s285 = ssub.s32 %s31, %s38
      %s286 = sor.u32 %s284, %s285
      %p287 = scmp.eq.s32.totalorder %s286, 0
      %s289 = sadd.s32 %s288, 1
      %s290 = scalar_select %p287, %s288, %s289
      %p293 = pneg %p287
      %p294 = scmp.eq.s32.totalorder %s23, 1
      %p295 = por %p293, %p294
      %p296 = scmp.ne.s32.totalorder %s288, %s291
      %p297 = scmp.eq.s32.totalorder %s23, 0
      %p298 = por %p296, %p297
      %p299 = scmp.ne.s32.totalorder %s288, %s291
      %p300 = scmp.eq.s32.totalorder %s28, 1
      %p301 = por %p299, %p300
      %p302 = scmp.ne.s32.totalorder %s291, %s292
      %p303 = scmp.eq.s32.totalorder %s28, 0
      %p304 = por %p302, %p303
      %p305 = scmp.ne.s32.totalorder %s291, %s292
      %p306 = scmp.eq.s32.totalorder %s29, 1
      %p307 = por %p305, %p306
      %p309 = scmp.ne.s32.totalorder %s292, %s308
      %p310 = scmp.eq.s32.totalorder %s29, 0
      %p311 = por %p309, %p310
      %p312 = scmp.le.s32.totalorder 1, %s23
      %p313 = scmp.lt.s32.totalorder %s23, 3
      %p314 = pnand %p312, %p313
      %p315 = pneg %p314
      // Predicated region
      $region9: #{tpu_custom_call.1} parent=5 // pred_check
        _
      $region10: #{tpu_custom_call.1} parent=5 // pred_check_branch
        %317 = sbr.rel (%p314) target = $region12
      $region11: #{tpu_custom_call.1} parent=5 // pred_region
        %s318 = ssub.s32 %s23, 1
        // Predicated region
        $region13: #{tpu_custom_call.1} parent=11 // pred_check
          %p319 = pneg %p84
        $region14: #{tpu_custom_call.1} parent=11 // pred_check_branch
          %321 = sbr.rel (%p319) target = $region16
        $region15: #{tpu_custom_call.1} parent=11 // pred_region
          _
        $region16: #{tpu_custom_call.1} parent=11 // pred_fallthru
          _
        // Predicated region
        $region17: #{tpu_custom_call.1} parent=11 // pred_check
          %p322 = pneg %p105
        $region18: #{tpu_custom_call.1} parent=11 // pred_check_branch
          %324 = sbr.rel (%p322) target = $region20
        $region19: #{tpu_custom_call.1} parent=11 // pred_region
          _
        $region20: #{tpu_custom_call.1} parent=11 // pred_fallthru
          _
        // Predicated region
        $region21: #{tpu_custom_call.1} parent=11 // pred_check
          %p325 = pneg %p126
        $region22: #{tpu_custom_call.1} parent=11 // pred_check_branch
          %327 = sbr.rel (%p325) target = $region24
        $region23: #{tpu_custom_call.1} parent=11 // pred_region
          _
        $region24: #{tpu_custom_call.1} parent=11 // pred_fallthru
          _
        // Predicated region
        $region25: #{tpu_custom_call.1} parent=11 // pred_check
          %p328 = pneg %p199
        $region26: #{tpu_custom_call.1} parent=11 // pred_check_branch
          %330 = sbr.rel (%p328) target = $region28
        $region27: #{tpu_custom_call.1} parent=11 // pred_region
          _
        $region28: #{tpu_custom_call.1} parent=11 // pred_fallthru
          _
        // Predicated region
        $region29: #{tpu_custom_call.1} parent=11 // pred_check
          %p331 = pneg %p220
        $region30: #{tpu_custom_call.1} parent=11 // pred_check_branch
          %333 = sbr.rel (%p331) target = $region32
        $region31: #{tpu_custom_call.1} parent=11 // pred_region
          _
        $region32: #{tpu_custom_call.1} parent=11 // pred_fallthru
          _
      $region12: #{tpu_custom_call.1} parent=5 // pred_fallthru
        _
      %p334 = scmp.lt.s32.totalorder %s23, 2
      // Predicated region
      $region33: #{tpu_custom_call.1} parent=5 // pred_check
        %p335 = pneg %p334
      $region34: #{tpu_custom_call.1} parent=5 // pred_check_branch
        %337 = sbr.rel (%p335) target = $region36
      $region35: #{tpu_custom_call.1} parent=5 // pred_region
        // Predicated region
        $region37: #{tpu_custom_call.1} parent=35 // pred_check
          %p338 = pneg %p57
        $region38: #{tpu_custom_call.1} parent=35 // pred_check_branch
          %340 = sbr.rel (%p338) target = $region40
        $region39: #{tpu_custom_call.1} parent=35 // pred_region
          %s341 = smul.u32 2, %s31
          %p342 = scmp.lt.s32.totalorder %s30, 1
          %s343 = scalar_select %p342, %s30, 1
          %p344 = scmp.lt.s32.totalorder %s341, 1
          %s345 = scalar_select %p344, %s341, 1
          %s346 = smul.addr %s343, 2
          %s347 = sadd.s32 %s345, %s346
          %s348 = smul.addr %s347, 4
          %s349 = scalar_lea.vmem %s0, %s348
          %s350 = smul.u32 2, %s31
        $region40: #{tpu_custom_call.1} parent=35 // pred_fallthru
          _
        // Predicated region
        $region41: #{tpu_custom_call.1} parent=35 // pred_check
          %p351 = pneg %p146
        $region42: #{tpu_custom_call.1} parent=35 // pred_check_branch
          %353 = sbr.rel (%p351) target = $region44
        $region43: #{tpu_custom_call.1} parent=35 // pred_region
          %p354 = scmp.lt.s32.totalorder %s30, 1
          %s355 = scalar_select %p354, %s30, 1
          %s356 = smul.addr %s355, 4
          %s357 = smul.addr %s356, 4
          %s358 = scalar_lea.vmem %s4, %s357
        $region44: #{tpu_custom_call.1} parent=35 // pred_fallthru
          _
        // Predicated region
        $region45: #{tpu_custom_call.1} parent=35 // pred_check
          %p359 = pneg %p172
        $region46: #{tpu_custom_call.1} parent=35 // pred_check_branch
          %361 = sbr.rel (%p359) target = $region48
        $region47: #{tpu_custom_call.1} parent=35 // pred_region
          %p362 = scmp.lt.s32.totalorder %s30, 1
          %s363 = scalar_select %p362, %s30, 1
          %s364 = smul.addr %s363, 4
          %s365 = smul.addr %s364, 4
          %s366 = scalar_lea.vmem %s5, %s365
        $region48: #{tpu_custom_call.1} parent=35 // pred_fallthru
          _
      $region36: #{tpu_custom_call.1} parent=5 // pred_fallthru
        _
      %p367 = scmp.le.s32.totalorder 1, %s23
      %p368 = scmp.lt.s32.totalorder %s23, 3
      %p369 = pnand %p367, %p368
      %p370 = pneg %p369
      // Predicated region
      $region49: #{tpu_custom_call.1} parent=5 // pred_check
        _
      $region50: #{tpu_custom_call.1} parent=5 // pred_check_branch
        %372 = sbr.rel (%p369) target = $region52
      $region51: #{tpu_custom_call.1} parent=5 // pred_region
        %s373 = ssub.s32 %s23, 1
        %s374 = smul.u32 2, %s33
        %p375 = scmp.lt.s32.totalorder %s32, 1
        %s376 = scalar_select %p375, %s32, 1
        %p377 = scmp.lt.s32.totalorder %s374, 1
        %s378 = scalar_select %p377, %s374, 1
        %s379 = smul.addr %s376, 2
        %s380 = sadd.s32 %s378, %s379
        %s381 = smul.addr %s380, 4
        %s382 = scalar_lea.vmem %s0, %s381
        %p383 = pneg %p63
        %p384 = pneg %p60
        %p385 = pneg %p84
        %p386 = pneg %p81
        %p387 = pneg %p105
        %p388 = pneg %p102
        %p389 = pneg %p126
        %p390 = pneg %p123
        %p391 = scmp.lt.s32.totalorder %s32, 1
        %s392 = scalar_select %p391, %s32, 1
        %s393 = smul.addr %s392, 4
        %s394 = smul.addr %s393, 4
        %s395 = scalar_lea.vmem %s4, %s394
        %p396 = pneg %p152
        %p397 = pneg %p149
        %p398 = scmp.lt.s32.totalorder %s32, 1
        %s399 = scalar_select %p398, %s32, 1
        %s400 = smul.addr %s399, 4
        %s401 = smul.addr %s400, 4
        %s402 = scalar_lea.vmem %s5, %s401
        %p403 = pneg %p178
        %p404 = pneg %p175
        %p405 = pneg %p199
        %p406 = pneg %p196
        %p407 = pneg %p220
        %p408 = pneg %p217
        %p409 = pneg %p248
        %p410 = pneg %p245
        %s411 = sand.u32 %s235, 1
        %s412 = scalar_lea.sflag [#allocation3], %s411
        %s413 = sand.u32 %s235, 1
        %s414 = smul.addr %s413, 16
        %s415 = scalar_lea.vmem [#allocation2], %s414
        %p416 = pneg %p276
        %p417 = pneg %p273
        %s418 = sand.u32 %s28, 1
        %s419 = scalar_lea.sflag [#allocation5], %s418
        %s420 = sand.u32 %s263, 1
        %s421 = smul.addr %s420, 16
        %s422 = scalar_lea.vmem [#allocation4], %s421
        %p423 = pneg %p304
        %p424 = pneg %p301
        %s425 = sand.u32 %s28, 1
        %s426 = scalar_lea.sflag [#allocation5], %s425
        %s427 = sand.u32 %s291, 1
        %s428 = smul.addr %s427, 16
        %s429 = scalar_lea.vmem [#allocation6], %s428
        %s430 = smul.u32 2, %s33
        %p431 = scmp.lt.s32.totalorder %s32, 1
        %s432 = scalar_select %p431, %s32, 1
        %p433 = scmp.lt.s32.totalorder %s430, 1
        %s434 = scalar_select %p433, %s430, 1
        %s435 = smul.addr %s432, 2
        %s436 = sadd.s32 %s434, %s435
        %s437 = smul.addr %s436, 4
        %s438 = scalar_lea.vmem %s0, %s437
        %s439 = smul.u32 2, %s33
        %p440 = scmp.lt.s32.totalorder %s32, 1
        %s441 = scalar_select %p440, %s32, 1
        %s442 = smul.addr %s441, 4
        %s443 = smul.addr %s442, 4
        %s444 = scalar_lea.vmem %s4, %s443
        %p445 = scmp.lt.s32.totalorder %s32, 1
        %s446 = scalar_select %p445, %s32, 1
        %s447 = smul.addr %s446, 4
        %s448 = smul.addr %s447, 4
        %s449 = scalar_lea.vmem %s5, %s448
        %s450 = smul.u32 2, %s33
        %s451 = smul.u32 2, %s33
        %s452 = smul.u32 2, %s33
        %v454 = vld [vmem:[%s438] sm:$0xf]
        %v455 = vld [vmem:[%s438 + $0x4] sm:$0xf]
        %v456 = vld [vmem:[%s1] sm:$0xf]
        %v457 = vld [vmem:[%s1 + $0x4] sm:$0xf]
        %v458 = vld [vmem:[%s1 + $0x8] sm:$0xf]
        %v459 = vld [vmem:[%s1 + $0xc] sm:$0xf]
        %v462 = vunpack.c.l.b16 %v454
        %v463 = vunpack.c.l.b16 %v455
        %v464 = vpack.c.b16 %v463, %v462
        %v469 = vunpack.c.l.b16 %v456
        %v470 = vunpack.c.l.b16 %v457
        %v471 = vunpack.c.l.b16 %v458
        %v472 = vunpack.c.l.b16 %v459
        %v473 = vpack.c.b16 %v470, %v469
        %v474 = vpack.c.b16 %v472, %v471
        %vm477 = vcmask 261120
        %v479 = vsel %vm477, %v464, 0
        %481 = vmatprep.subr.bf16.mxu0 0
        %482 = vmatpush1.bf16.msra.mxu0 %v473
        %483 = vmatprep.subr.bf16.mxu0 0
        %484 = vmatpush1.bf16.msra.mxu0 %v474
        %485 = vmatprep.subr.bf16.mxu0 0
        %486 = vmatpush1.bf16.msra.mxu0 0
        %487 = vmatprep.subr.bf16.mxu0 0
        %488 = vmatpush1.bf16.msra.mxu0 0
        %489 = vmatprep.subr.bf16.mxu0 0
        %490 = vmatpush1.bf16.msra.mxu0 0
        %491 = vmatprep.subr.bf16.mxu0 0
        %492 = vmatpush1.bf16.msra.mxu0 0
        %493 = vmatprep.subr.bf16.mxu0 0
        %494 = vmatpush1.bf16.msra.mxu0 0
        %495 = vmatprep.subr.bf16.mxu0 0
        %496 = vmatpush1.bf16.msra.mxu0 0
        %497 = vmatprep.subr.bf16.mxu0 0
        %498 = vmatpush1.bf16.msra.mxu0 0
        %499 = vmatprep.subr.bf16.mxu0 0
        %500 = vmatpush1.bf16.msra.mxu0 0
        %501 = vmatprep.subr.bf16.mxu0 0
        %502 = vmatpush1.bf16.msra.mxu0 0
        %503 = vmatprep.subr.bf16.mxu0 0
        %504 = vmatpush1.bf16.msra.mxu0 0
        %505 = vmatprep.subr.bf16.mxu0 0
        %506 = vmatpush1.bf16.msra.mxu0 0
        %507 = vmatprep.subr.bf16.mxu0 0
        %508 = vmatpush1.bf16.msra.mxu0 0
        %509 = vmatprep.subr.bf16.mxu0 0
        %510 = vmatpush1.bf16.msra.mxu0 0
        %511 = vmatprep.subr.bf16.mxu0 0
        %512 = vmatpush1.bf16.msra.mxu0 0
        %513 = vmatprep.mubr.bf16.mxu0 0
        %514 = vmatmul.mubr.bf16.gmra.mrb[0].mxu0 %v479
        %v515 = vpop.f32.mrb[0].mxu0
        %v516 = vadd.f32 0.0, %v515
        %v517 = vpop.f32.mrb[0].mxu0
        %v518 = vpop.f32.mrb[0].mxu0
        %v519 = vadd.f32 0.0, %v518
        %v520 = vpop.f32.mrb[0].mxu0
        %521 = vdwg.mxu0
        %v522 = vld [vmem:[%s2] sm:$0xf]
        %v523 = vld [vmem:[%s2 + $0x4] sm:$0xf]
        %v524 = vld [vmem:[%s2 + $0x8] sm:$0xf]
        %v525 = vld [vmem:[%s2 + $0xc] sm:$0xf]
        %v526 = vld [vmem:[%s3] sm:$0x3]
        %v527 = vmul.f32 %v516, %v516
        %v528 = vmul.f32 %v519, %v519
        %v529 = vpack.c.bf16 %v528, %v527
        %v534 = vunpack.c.l.b16 %v522
        %v535 = vunpack.c.l.b16 %v523
        %v536 = vunpack.c.l.b16 %v524
        %v537 = vunpack.c.l.b16 %v525
        %v538 = vpack.c.b16 %v535, %v534
        %v539 = vpack.c.b16 %v537, %v536
        %v543 = vsel %vm477, %v529, 0
        %545 = vmatprep.subr.bf16.mxu0 0
        %546 = vmatpush1.bf16.msra.mxu0 %v538
        %547 = vmatprep.subr.bf16.mxu0 0
        %548 = vmatpush1.bf16.msra.mxu0 %v539
        %549 = vmatprep.subr.bf16.mxu0 0
        %550 = vmatpush1.bf16.msra.mxu0 0
        %551 = vmatprep.subr.bf16.mxu0 0
        %552 = vmatpush1.bf16.msra.mxu0 0
        %553 = vmatprep.subr.bf16.mxu0 0
        %554 = vmatpush1.bf16.msra.mxu0 0
        %555 = vmatprep.subr.bf16.mxu0 0
        %556 = vmatpush1.bf16.msra.mxu0 0
        %557 = vmatprep.subr.bf16.mxu0 0
        %558 = vmatpush1.bf16.msra.mxu0 0
        %559 = vmatprep.subr.bf16.mxu0 0
        %560 = vmatpush1.bf16.msra.mxu0 0
        %561 = vmatprep.subr.bf16.mxu0 0
        %562 = vmatpush1.bf16.msra.mxu0 0
        %563 = vmatprep.subr.bf16.mxu0 0
        %564 = vmatpush1.bf16.msra.mxu0 0
        %565 = vmatprep.subr.bf16.mxu0 0
        %566 = vmatpush1.bf16.msra.mxu0 0
        %567 = vmatprep.subr.bf16.mxu0 0
        %568 = vmatpush1.bf16.msra.mxu0 0
        %569 = vmatprep.subr.bf16.mxu0 0
        %570 = vmatpush1.bf16.msra.mxu0 0
        %571 = vmatprep.subr.bf16.mxu0 0
        %572 = vmatpush1.bf16.msra.mxu0 0
        %573 = vmatprep.subr.bf16.mxu0 0
        %574 = vmatpush1.bf16.msra.mxu0 0
        %575 = vmatprep.subr.bf16.mxu0 0
        %576 = vmatpush1.bf16.msra.mxu0 0
        %577 = vmatprep.mubr.bf16.mxu0 0
        %578 = vmatmul.mubr.bf16.gmra.mrb[0].mxu0 %v543
        %v579 = vpop.f32.mrb[0].mxu0
        %v580 = vadd.f32 0.0, %v579
        %v581 = vpop.f32.mrb[0].mxu0
        %v582 = vpop.f32.mrb[0].mxu0
        %v583 = vadd.f32 0.0, %v582
        %v584 = vpop.f32.mrb[0].mxu0
        %585 = vdwg.mxu0
        %v586 = vmax.f32 %v580, 1e-24
        %v587 = vmax.f32 %v583, 1e-24
        %v588 = vrsqrt.pop %v586
        %v589 = vrsqrt.pop %v587
        %v590 = vpack.c.bf16 %v589, %v588
        %vm591 = vcmask 31744
        %v593 = vsel %vm591, %v590, 0
        %vm595 = vcmask 1041408
        %v597 = vsel %vm595, %v526, 0
        %599 = vmatprep.subr.bf16.mxu0 0
        %600 = vmatpush1.bf16.msra.mxu0 %v597
        %601 = vmatprep.subr.bf16.mxu0 0
        %602 = vmatpush1.bf16.msra.mxu0 0
        %603 = vmatprep.subr.bf16.mxu0 0
        %604 = vmatpush1.bf16.msra.mxu0 0
        %605 = vmatprep.subr.bf16.mxu0 0
        %606 = vmatpush1.bf16.msra.mxu0 0
        %607 = vmatprep.subr.bf16.mxu0 0
        %608 = vmatpush1.bf16.msra.mxu0 0
        %609 = vmatprep.subr.bf16.mxu0 0
        %610 = vmatpush1.bf16.msra.mxu0 0
        %611 = vmatprep.subr.bf16.mxu0 0
        %612 = vmatpush1.bf16.msra.mxu0 0
        %613 = vmatprep.subr.bf16.mxu0 0
        %614 = vmatpush1.bf16.msra.mxu0 0
        %615 = vmatprep.subr.bf16.mxu0 0
        %616 = vmatpush1.bf16.msra.mxu0 0
        %617 = vmatprep.subr.bf16.mxu0 0
        %618 = vmatpush1.bf16.msra.mxu0 0
        %619 = vmatprep.subr.bf16.mxu0 0
        %620 = vmatpush1.bf16.msra.mxu0 0
        %621 = vmatprep.subr.bf16.mxu0 0
        %622 = vmatpush1.bf16.msra.mxu0 0
        %623 = vmatprep.subr.bf16.mxu0 0
        %624 = vmatpush1.bf16.msra.mxu0 0
        %625 = vmatprep.subr.bf16.mxu0 0
        %626 = vmatpush1.bf16.msra.mxu0 0
        %627 = vmatprep.subr.bf16.mxu0 0
        %628 = vmatpush1.bf16.msra.mxu0 0
        %629 = vmatprep.subr.bf16.mxu0 0
        %630 = vmatpush1.bf16.msra.mxu0 0
        %631 = vmatprep.mubr.bf16.mxu0 0
        %632 = vmatmul.mubr.bf16.gmra.mrb[0].mxu0 %v593
        %v633 = vpop.f32.mrb[0].mxu0
        %v634 = vadd.f32 0.0, %v633
        %v635 = vpop.f32.mrb[0].mxu0
        %v636 = vpop.f32.mrb[0].mxu0
        %v637 = vadd.f32 0.0, %v636
        %v638 = vpop.f32.mrb[0].mxu0
        %639 = vdwg.mxu0
        %v640 = vmul.f32 %v516, %v634
        %v641 = vmul.f32 %v519, %v637
        %v642 = vpack.c.bf16 %v641, %v640
        %644 = vrot.lane.b32.xlu0 %v529, 96
        %v645 = vpop.permute.xlu0 %644
        %v647 = vsel %vm477, %v645, 0
        %649 = vmatprep.subr.bf16.mxu0 0
        %650 = vmatpush1.bf16.msra.mxu0 %v538
        %651 = vmatprep.subr.bf16.mxu0 0
        %652 = vmatpush1.bf16.msra.mxu0 %v539
        %653 = vmatprep.subr.bf16.mxu0 0
        %654 = vmatpush1.bf16.msra.mxu0 0
        %655 = vmatprep.subr.bf16.mxu0 0
        %656 = vmatpush1.bf16.msra.mxu0 0
        %657 = vmatprep.subr.bf16.mxu0 0
        %658 = vmatpush1.bf16.msra.mxu0 0
        %659 = vmatprep.subr.bf16.mxu0 0
        %660 = vmatpush1.bf16.msra.mxu0 0
        %661 = vmatprep.subr.bf16.mxu0 0
        %662 = vmatpush1.bf16.msra.mxu0 0
        %663 = vmatprep.subr.bf16.mxu0 0
        %664 = vmatpush1.bf16.msra.mxu0 0
        %665 = vmatprep.subr.bf16.mxu0 0
        %666 = vmatpush1.bf16.msra.mxu0 0
        %667 = vmatprep.subr.bf16.mxu0 0
        %668 = vmatpush1.bf16.msra.mxu0 0
        %669 = vmatprep.subr.bf16.mxu0 0
        %670 = vmatpush1.bf16.msra.mxu0 0
        %671 = vmatprep.subr.bf16.mxu0 0
        %672 = vmatpush1.bf16.msra.mxu0 0
        %673 = vmatprep.subr.bf16.mxu0 0
        %674 = vmatpush1.bf16.msra.mxu0 0
        %675 = vmatprep.subr.bf16.mxu0 0
        %676 = vmatpush1.bf16.msra.mxu0 0
        %677 = vmatprep.subr.bf16.mxu0 0
        %678 = vmatpush1.bf16.msra.mxu0 0
        %679 = vmatprep.subr.bf16.mxu0 0
        %680 = vmatpush1.bf16.msra.mxu0 0
        %681 = vmatprep.mubr.bf16.mxu0 0
        %682 = vmatmul.mubr.bf16.gmra.mrb[0].mxu0 %v647
        %v683 = vpop.f32.mrb[0].mxu0
        %v684 = vadd.f32 0.0, %v683
        %v685 = vpop.f32.mrb[0].mxu0
        %v686 = vpop.f32.mrb[0].mxu0
        %v687 = vadd.f32 0.0, %v686
        %v688 = vpop.f32.mrb[0].mxu0
        %689 = vdwg.mxu0
        %v690 = vmax.f32 %v684, 1e-24
        %v691 = vmax.f32 %v687, 1e-24
        %v692 = vrsqrt.pop %v690
        %v693 = vrsqrt.pop %v691
        %v694 = vpack.c.bf16 %v693, %v692
        %v696 = vsel %vm591, %v694, 0
        %698 = vmatprep.subr.bf16.mxu0 0
        %699 = vmatpush1.bf16.msra.mxu0 %v597
        %700 = vmatprep.subr.bf16.mxu0 0
        %701 = vmatpush1.bf16.msra.mxu0 0
        %702 = vmatprep.subr.bf16.mxu0 0
        %703 = vmatpush1.bf16.msra.mxu0 0
        %704 = vmatprep.subr.bf16.mxu0 0
        %705 = vmatpush1.bf16.msra.mxu0 0
        %706 = vmatprep.subr.bf16.mxu0 0
        %707 = vmatpush1.bf16.msra.mxu0 0
        %708 = vmatprep.subr.bf16.mxu0 0
        %709 = vmatpush1.bf16.msra.mxu0 0
        %710 = vmatprep.subr.bf16.mxu0 0
        %711 = vmatpush1.bf16.msra.mxu0 0
        %712 = vmatprep.subr.bf16.mxu0 0
        %713 = vmatpush1.bf16.msra.mxu0 0
        %714 = vmatprep.subr.bf16.mxu0 0
        %715 = vmatpush1.bf16.msra.mxu0 0
        %716 = vmatprep.subr.bf16.mxu0 0
        %717 = vmatpush1.bf16.msra.mxu0 0
        %718 = vmatprep.subr.bf16.mxu0 0
        %719 = vmatpush1.bf16.msra.mxu0 0
        %720 = vmatprep.subr.bf16.mxu0 0
        %721 = vmatpush1.bf16.msra.mxu0 0
        %722 = vmatprep.subr.bf16.mxu0 0
        %723 = vmatpush1.bf16.msra.mxu0 0
        %724 = vmatprep.subr.bf16.mxu0 0
        %725 = vmatpush1.bf16.msra.mxu0 0
        %726 = vmatprep.subr.bf16.mxu0 0
        %727 = vmatpush1.bf16.msra.mxu0 0
        %728 = vmatprep.subr.bf16.mxu0 0
        %729 = vmatpush1.bf16.msra.mxu0 0
        %730 = vmatprep.mubr.bf16.mxu0 0
        %731 = vmatmul.mubr.bf16.gmra.mrb[0].mxu0 %v696
        %v732 = vpop.f32.mrb[0].mxu0
        %v733 = vadd.f32 0.0, %v732
        %v734 = vpop.f32.mrb[0].mxu0
        %v735 = vpop.f32.mrb[0].mxu0
        %v736 = vadd.f32 0.0, %v735
        %v737 = vpop.f32.mrb[0].mxu0
        %738 = vdwg.mxu0
        %741 = vrot.lane.b32.xlu0 %v733, 32
        %v742 = vpop.permute.xlu0 %741
        %743 = vrot.lane.b32.xlu0 %v736, 32
        %v744 = vpop.permute.xlu0 %743
        %v747 = vmul.f32 %v516, %v742
        %v748 = vmul.f32 %v519, %v744
        %v749 = vpack.c.bf16 %v748, %v747
        %v750 = vld [vmem:[%s444] sm:$0xf]
        %v751 = vld [vmem:[%s444 + $0x4] sm:$0xf]
        %v752 = vld [vmem:[%s444 + $0x8] sm:$0xf]
        %v753 = vld [vmem:[%s444 + $0xc] sm:$0xf]
        %v758 = vunpack.c.l.b16 %v750
        %v759 = vunpack.c.l.b16 %v751
        %v760 = vunpack.c.l.b16 %v752
        %v761 = vunpack.c.l.b16 %v753
        %v762 = vpack.c.b16 %v759, %v758
        %v763 = vpack.c.b16 %v761, %v760
        %v767 = vsel %vm477, %v642, 0
        %769 = vmatprep.subr.bf16.mxu0 0
        %770 = vmatpush1.bf16.msra.mxu0 %v762
        %771 = vmatprep.subr.bf16.mxu0 0
        %772 = vmatpush1.bf16.msra.mxu0 %v763
        %773 = vmatprep.subr.bf16.mxu0 0
        %774 = vmatpush1.bf16.msra.mxu0 0
        %775 = vmatprep.subr.bf16.mxu0 0
        %776 = vmatpush1.bf16.msra.mxu0 0
        %777 = vmatprep.subr.bf16.mxu0 0
        %778 = vmatpush1.bf16.msra.mxu0 0
        %779 = vmatprep.subr.bf16.mxu0 0
        %780 = vmatpush1.bf16.msra.mxu0 0
        %781 = vmatprep.subr.bf16.mxu0 0
        %782 = vmatpush1.bf16.msra.mxu0 0
        %783 = vmatprep.subr.bf16.mxu0 0
        %784 = vmatpush1.bf16.msra.mxu0 0
        %785 = vmatprep.subr.bf16.mxu0 0
        %786 = vmatpush1.bf16.msra.mxu0 0
        %787 = vmatprep.subr.bf16.mxu0 0
        %788 = vmatpush1.bf16.msra.mxu0 0
        %789 = vmatprep.subr.bf16.mxu0 0
        %790 = vmatpush1.bf16.msra.mxu0 0
        %791 = vmatprep.subr.bf16.mxu0 0
        %792 = vmatpush1.bf16.msra.mxu0 0
        %793 = vmatprep.subr.bf16.mxu0 0
        %794 = vmatpush1.bf16.msra.mxu0 0
        %795 = vmatprep.subr.bf16.mxu0 0
        %796 = vmatpush1.bf16.msra.mxu0 0
        %797 = vmatprep.subr.bf16.mxu0 0
        %798 = vmatpush1.bf16.msra.mxu0 0
        %799 = vmatprep.subr.bf16.mxu0 0
        %800 = vmatpush1.bf16.msra.mxu0 0
        %801 = vmatprep.mubr.bf16.mxu0 0
        %802 = vmatmul.mubr.bf16.gmra.mrb[0].mxu0 %v767
        %v803 = vpop.f32.mrb[0].mxu0
        %v804 = vadd.f32 0.0, %v803
        %v805 = vpop.f32.mrb[0].mxu0
        %v806 = vpop.f32.mrb[0].mxu0
        %v807 = vadd.f32 0.0, %v806
        %v808 = vpop.f32.mrb[0].mxu0
        %809 = vdwg.mxu0
        %v810 = vld [vmem:[%s449] sm:$0xf]
        %v811 = vld [vmem:[%s449 + $0x4] sm:$0xf]
        %v812 = vld [vmem:[%s449 + $0x8] sm:$0xf]
        %v813 = vld [vmem:[%s449 + $0xc] sm:$0xf]
        %815 = vrot.lane.b32.xlu0 %v749, 96
        %v816 = vpop.permute.xlu0 %815
        %v821 = vunpack.c.l.b16 %v810
        %v822 = vunpack.c.l.b16 %v811
        %v823 = vunpack.c.l.b16 %v812
        %v824 = vunpack.c.l.b16 %v813
        %v825 = vpack.c.b16 %v822, %v821
        %v826 = vpack.c.b16 %v824, %v823
        %v830 = vsel %vm477, %v816, 0
        %832 = vmatprep.subr.bf16.mxu0 0
        %833 = vmatpush1.bf16.msra.mxu0 %v825
        %834 = vmatprep.subr.bf16.mxu0 0
        %835 = vmatpush1.bf16.msra.mxu0 %v826
        %836 = vmatprep.subr.bf16.mxu0 0
        %837 = vmatpush1.bf16.msra.mxu0 0
        %838 = vmatprep.subr.bf16.mxu0 0
        %839 = vmatpush1.bf16.msra.mxu0 0
        %840 = vmatprep.subr.bf16.mxu0 0
        %841 = vmatpush1.bf16.msra.mxu0 0
        %842 = vmatprep.subr.bf16.mxu0 0
        %843 = vmatpush1.bf16.msra.mxu0 0
        %844 = vmatprep.subr.bf16.mxu0 0
        %845 = vmatpush1.bf16.msra.mxu0 0
        %846 = vmatprep.subr.bf16.mxu0 0
        %847 = vmatpush1.bf16.msra.mxu0 0
        %848 = vmatprep.subr.bf16.mxu0 0
        %849 = vmatpush1.bf16.msra.mxu0 0
        %850 = vmatprep.subr.bf16.mxu0 0
        %851 = vmatpush1.bf16.msra.mxu0 0
        %852 = vmatprep.subr.bf16.mxu0 0
        %853 = vmatpush1.bf16.msra.mxu0 0
        %854 = vmatprep.subr.bf16.mxu0 0
        %855 = vmatpush1.bf16.msra.mxu0 0
        %856 = vmatprep.subr.bf16.mxu0 0
        %857 = vmatpush1.bf16.msra.mxu0 0
        %858 = vmatprep.subr.bf16.mxu0 0
        %859 = vmatpush1.bf16.msra.mxu0 0
        %860 = vmatprep.subr.bf16.mxu0 0
        %861 = vmatpush1.bf16.msra.mxu0 0
        %862 = vmatprep.subr.bf16.mxu0 0
        %863 = vmatpush1.bf16.msra.mxu0 0
        %864 = vmatprep.mubr.bf16.mxu0 0
        %865 = vmatmul.mubr.bf16.gmra.mrb[0].mxu0 %v830
        %v866 = vpop.f32.mrb[0].mxu0
        %v867 = vadd.f32 0.0, %v866
        %v868 = vpop.f32.mrb[0].mxu0
        %v869 = vpop.f32.mrb[0].mxu0
        %v870 = vadd.f32 0.0, %v869
        %v871 = vpop.f32.mrb[0].mxu0
        %872 = vdwg.mxu0
        %873 = vst [vmem:[%s422] sm:$0xff] %v804
        %874 = vst [vmem:[%s422 + $0x8] sm:$0xff] %v807
        %875 = vst [vmem:[%s429] sm:$0xff] %v867
        %876 = vst [vmem:[%s429 + $0x8] sm:$0xff] %v870
        %v877 = vpack.c.bf16 %v807, %v804
        %v878 = vpack.c.bf16 %v870, %v867
        %v879 = vld [vmem:[%s6] sm:$0xf]
        %v880 = vld [vmem:[%s6 + $0x4] sm:$0xf]
        %v881 = vld [vmem:[%s6 + $0x8] sm:$0xf]
        %v882 = vld [vmem:[%s6 + $0xc] sm:$0xf]
        %v883 = vld [vmem:[%s6 + $0x10] sm:$0xf]
        %v884 = vld [vmem:[%s6 + $0x14] sm:$0xf]
        %v885 = vld [vmem:[%s6 + $0x18] sm:$0xf]
        %v886 = vld [vmem:[%s6 + $0x1c] sm:$0xf]
        %v887 = vld [vmem:[%s6 + $0x20] sm:$0xf]
        %v888 = vld [vmem:[%s6 + $0x24] sm:$0xf]
        %v889 = vld [vmem:[%s6 + $0x28] sm:$0xf]
        %v890 = vld [vmem:[%s6 + $0x2c] sm:$0xf]
        %v891 = vld [vmem:[%s6 + $0x30] sm:$0xf]
        %v892 = vld [vmem:[%s6 + $0x34] sm:$0xf]
        %v893 = vld [vmem:[%s6 + $0x38] sm:$0xf]
        %v894 = vld [vmem:[%s6 + $0x3c] sm:$0xf]
        %v895 = vld [vmem:[%s6 + $0x40] sm:$0xf]
        %v896 = vld [vmem:[%s6 + $0x44] sm:$0xf]
        %v897 = vld [vmem:[%s6 + $0x48] sm:$0xf]
        %v898 = vld [vmem:[%s6 + $0x4c] sm:$0xf]
        %v899 = vld [vmem:[%s6 + $0x50] sm:$0xf]
        %v900 = vld [vmem:[%s6 + $0x54] sm:$0xf]
        %v901 = vld [vmem:[%s6 + $0x58] sm:$0xf]
        %v902 = vld [vmem:[%s6 + $0x5c] sm:$0xf]
        %v903 = vld [vmem:[%s6 + $0x60] sm:$0xf]
        %v904 = vld [vmem:[%s6 + $0x64] sm:$0xf]
        %v905 = vld [vmem:[%s6 + $0x68] sm:$0xf]
        %v906 = vld [vmem:[%s6 + $0x6c] sm:$0xf]
        %v907 = vld [vmem:[%s6 + $0x70] sm:$0xf]
        %v908 = vld [vmem:[%s6 + $0x74] sm:$0xf]
        %v909 = vld [vmem:[%s6 + $0x78] sm:$0xf]
        %v910 = vld [vmem:[%s6 + $0x7c] sm:$0xf]
        %v911 = vld [vmem:[%s7] sm:$0x1]
        %v913 = vlaneseq
        %v914 = vshrl.u32 %v913, 7
        %v915 = vsub.s32 0, %v914
        %v916 = vrot.slane %v911, %v915
        %v950 = vunpack.c.l.b16 %v879
        %v951 = vunpack.c.l.b16 %v880
        %v952 = vunpack.c.l.b16 %v881
        %v953 = vunpack.c.l.b16 %v882
        %v954 = vunpack.c.l.b16 %v883
        %v955 = vunpack.c.l.b16 %v884
        %v956 = vunpack.c.l.b16 %v885
        %v957 = vunpack.c.l.b16 %v886
        %v958 = vunpack.c.l.b16 %v887
        %v959 = vunpack.c.l.b16 %v888
        %v960 = vunpack.c.l.b16 %v889
        %v961 = vunpack.c.l.b16 %v890
        %v962 = vunpack.c.l.b16 %v891
        %v963 = vunpack.c.l.b16 %v892
        %v964 = vunpack.c.l.b16 %v893
        %v965 = vunpack.c.l.b16 %v894
        %v966 = vunpack.c.l.b16 %v895
        %v967 = vunpack.c.l.b16 %v896
        %v968 = vunpack.c.l.b16 %v897
        %v969 = vunpack.c.l.b16 %v898
        %v970 = vunpack.c.l.b16 %v899
        %v971 = vunpack.c.l.b16 %v900
        %v972 = vunpack.c.l.b16 %v901
        %v973 = vunpack.c.l.b16 %v902
        %v974 = vunpack.c.l.b16 %v903
        %v975 = vunpack.c.l.b16 %v904
        %v976 = vunpack.c.l.b16 %v905
        %v977 = vunpack.c.l.b16 %v906
        %v978 = vunpack.c.l.b16 %v907
        %v979 = vunpack.c.l.b16 %v908
        %v980 = vunpack.c.l.b16 %v909
        %v981 = vunpack.c.l.b16 %v910
        %v982 = vpack.c.b16 %v951, %v950
        %v983 = vpack.c.b16 %v953, %v952
        %v984 = vpack.c.b16 %v955, %v954
        %v985 = vpack.c.b16 %v957, %v956
        %v986 = vpack.c.b16 %v959, %v958
        %v987 = vpack.c.b16 %v961, %v960
        %v988 = vpack.c.b16 %v963, %v962
        %v989 = vpack.c.b16 %v965, %v964
        %v990 = vpack.c.b16 %v967, %v966
        %v991 = vpack.c.b16 %v969, %v968
        %v992 = vpack.c.b16 %v971, %v970
        %v993 = vpack.c.b16 %v973, %v972
        %v994 = vpack.c.b16 %v975, %v974
        %v995 = vpack.c.b16 %v977, %v976
        %v996 = vpack.c.b16 %v979, %v978
        %v997 = vpack.c.b16 %v981, %v980
        %1014 = vmatprep.subr.bf16.mxu0 0
        %1015 = vmatpush1.bf16.msra.mxu0 %v982
        %1016 = vmatprep.subr.bf16.mxu0 0
        %1017 = vmatpush1.bf16.msra.mxu0 %v983
        %1018 = vmatprep.subr.bf16.mxu0 0
        %1019 = vmatpush1.bf16.msra.mxu0 %v984
        %1020 = vmatprep.subr.bf16.mxu0 0
        %1021 = vmatpush1.bf16.msra.mxu0 %v985
        %1022 = vmatprep.subr.bf16.mxu0 0
        %1023 = vmatpush1.bf16.msra.mxu0 %v986
        %1024 = vmatprep.subr.bf16.mxu0 0
        %1025 = vmatpush1.bf16.msra.mxu0 %v987
        %1026 = vmatprep.subr.bf16.mxu0 0
        %1027 = vmatpush1.bf16.msra.mxu0 %v988
        %1028 = vmatprep.subr.bf16.mxu0 0
        %1029 = vmatpush1.bf16.msra.mxu0 %v989
        %1030 = vmatprep.subr.bf16.mxu0 0
        %1031 = vmatpush1.bf16.msra.mxu0 %v990
        %1032 = vmatprep.subr.bf16.mxu0 0
        %1033 = vmatpush1.bf16.msra.mxu0 %v991
        %1034 = vmatprep.subr.bf16.mxu0 0
        %1035 = vmatpush1.bf16.msra.mxu0 %v992
        %1036 = vmatprep.subr.bf16.mxu0 0
        %1037 = vmatpush1.bf16.msra.mxu0 %v993
        %1038 = vmatprep.subr.bf16.mxu0 0
        %1039 = vmatpush1.bf16.msra.mxu0 %v994
        %1040 = vmatprep.subr.bf16.mxu0 0
        %1041 = vmatpush1.bf16.msra.mxu0 %v995
        %1042 = vmatprep.subr.bf16.mxu0 0
        %1043 = vmatpush1.bf16.msra.mxu0 %v996
        %1044 = vmatprep.subr.bf16.mxu0 0
        %1045 = vmatpush1.bf16.msra.mxu0 %v997
        %1046 = vmatprep.mubr.bf16.mxu0 %v878
        %1047 = vmatmul.mubr.bf16.gmra.mrb[0].mxu0 %v877
        %v1048 = vpop.f32.mrb[0].mxu0
        %v1049 = vadd.f32 %v916, %v1048
        %v1050 = vpop.f32.mrb[0].mxu0
        %v1051 = vpop.f32.mrb[0].mxu0
        %v1052 = vadd.f32 %v916, %v1051
        %v1053 = vpop.f32.mrb[0].mxu0
        %1054 = vdwg.mxu0
        %1055 = vst.msk [vmem:[%s415] sm:$0xff] %vm477, %v1049
        %1056 = vst.msk [vmem:[%s415 + $0x8] sm:$0xff] %vm477, %v1052
        %s1057 = sand.u32 %s235, 1
        %s1058 = scalar_lea.sflag [#allocation3], %s1057
        %s1059 = sand.u32 %s235, 1
        %s1060 = smul.addr %s1059, 16
        %s1061 = scalar_lea.vmem [#allocation2], %s1060
        %s1062 = sand.u32 %s28, 1
        %s1063 = scalar_lea.sflag [#allocation5], %s1062
        %s1064 = sand.u32 %s263, 1
        %s1065 = smul.addr %s1064, 16
        %s1066 = scalar_lea.vmem [#allocation4], %s1065
        %s1067 = sand.u32 %s28, 1
        %s1068 = scalar_lea.sflag [#allocation5], %s1067
        %s1069 = sand.u32 %s291, 1
        %s1070 = smul.addr %s1069, 16
        %s1071 = scalar_lea.vmem [#allocation6], %s1070
        // Predicated region
        $region53: #{tpu_custom_call.1} parent=51 // pred_check
          %p1072 = pneg %p245
        $region54: #{tpu_custom_call.1} parent=51 // pred_check_branch
          %1074 = sbr.rel (%p1072) target = $region56
        $region55: #{tpu_custom_call.1} parent=51 // pred_region
          %s1075 = smul.u32 2, %s33
          %s1077 = ssub.s32 256, 256
          %1078 = vsyncadd %s1058, %s1077
          %s1079 = smul.addr %s32, 2
          %s1080 = sadd.s32 %s1075, %s1079
          %s1081 = smul.addr %s1080, 128
          %s1082 = scalar_lea.hbm %s8, %s1081
          %s1083 = sshll.u32 %s1061, 4
          %s1084 = int_to_ptr.vmem [resolvable:$true] %s1083
          %1089 = dma.vmem_to_hbm [thread:$0]  %s1084, 256, %s1082, %s1058, 128, 128, 8
        $region56: #{tpu_custom_call.1} parent=51 // pred_fallthru
          _
        // Predicated region
        $region57: #{tpu_custom_call.1} parent=51 // pred_check
          %p1090 = pneg %p273
        $region58: #{tpu_custom_call.1} parent=51 // pred_check_branch
          %1092 = sbr.rel (%p1090) target = $region60
        $region59: #{tpu_custom_call.1} parent=51 // pred_region
          %s1093 = smul.u32 2, %s33
          %s1095 = ssub.s32 256, 256
          %1096 = vsyncadd %s1063, %s1095
          %s1097 = smul.addr %s32, 2
          %s1098 = sadd.s32 %s1093, %s1097
          %s1099 = smul.addr %s1098, 128
          %s1100 = scalar_lea.hbm %s9, %s1099
          %s1101 = sshll.u32 %s1066, 4
          %s1102 = int_to_ptr.vmem [resolvable:$true] %s1101
          %1107 = dma.vmem_to_hbm [thread:$0]  %s1102, 256, %s1100, %s1063, 128, 128, 8
        $region60: #{tpu_custom_call.1} parent=51 // pred_fallthru
          _
        // Predicated region
        $region61: #{tpu_custom_call.1} parent=51 // pred_check
          %p1108 = pneg %p301
        $region62: #{tpu_custom_call.1} parent=51 // pred_check_branch
          %1110 = sbr.rel (%p1108) target = $region64
        $region63: #{tpu_custom_call.1} parent=51 // pred_region
          %s1111 = smul.u32 2, %s33
          %s1113 = ssub.s32 256, 256
          %1114 = vsyncadd %s1068, %s1113
          %s1115 = smul.addr %s32, 2
          %s1116 = sadd.s32 %s1111, %s1115
          %s1117 = smul.addr %s1116, 128
          %s1118 = scalar_lea.hbm %s10, %s1117
          %s1119 = sshll.u32 %s1071, 4
          %s1120 = int_to_ptr.vmem [resolvable:$true] %s1119
          %1125 = dma.vmem_to_hbm [thread:$0]  %s1120, 256, %s1118, %s1068, 128, 128, 8
        $region64: #{tpu_custom_call.1} parent=51 // pred_fallthru
          _
      $region52: #{tpu_custom_call.1} parent=5 // pred_fallthru
        _
      %p1126 = scmp.le.s32.totalorder 2, %s23
      // Predicated region
      $region65: #{tpu_custom_call.1} parent=5 // pred_check
        %p1127 = pneg %p1126
      $region66: #{tpu_custom_call.1} parent=5 // pred_check_branch
        %1129 = sbr.rel (%p1127) target = $region68
      $region67: #{tpu_custom_call.1} parent=5 // pred_region
        %s1130 = ssub.s32 %s23, 2
        // Predicated region
        $region69: #{tpu_custom_call.1} parent=67 // pred_check
          %p1131 = pneg %p251
        $region70: #{tpu_custom_call.1} parent=67 // pred_check_branch
          %1133 = sbr.rel (%p1131) target = $region72
        $region71: #{tpu_custom_call.1} parent=67 // pred_region
          %s1134 = sand.u32 %s236, 1
          %s1135 = scalar_lea.sflag [#allocation3], %s1134
          %s1136 = sand.u32 %s236, 1
          %s1137 = smul.addr %s1136, 16
          %s1138 = scalar_lea.vmem [#allocation2], %s1137
          %1139 = dma.done %s1135, 256
        $region72: #{tpu_custom_call.1} parent=67 // pred_fallthru
          _
        // Predicated region
        $region73: #{tpu_custom_call.1} parent=67 // pred_check
          %p1140 = pneg %p279
        $region74: #{tpu_custom_call.1} parent=67 // pred_check_branch
          %1142 = sbr.rel (%p1140) target = $region76
        $region75: #{tpu_custom_call.1} parent=67 // pred_region
          %s1143 = sand.u32 %s29, 1
          %s1144 = scalar_lea.sflag [#allocation5], %s1143
          %s1145 = sand.u32 %s264, 1
          %s1146 = smul.addr %s1145, 16
          %s1147 = scalar_lea.vmem [#allocation4], %s1146
          %1148 = dma.done %s1144, 256
        $region76: #{tpu_custom_call.1} parent=67 // pred_fallthru
          _
        // Predicated region
        $region77: #{tpu_custom_call.1} parent=67 // pred_check
          %p1149 = pneg %p307
        $region78: #{tpu_custom_call.1} parent=67 // pred_check_branch
          %1151 = sbr.rel (%p1149) target = $region80
        $region79: #{tpu_custom_call.1} parent=67 // pred_region
          %s1152 = sand.u32 %s29, 1
          %s1153 = scalar_lea.sflag [#allocation5], %s1152
          %s1154 = sand.u32 %s292, 1
          %s1155 = smul.addr %s1154, 16
          %s1156 = scalar_lea.vmem [#allocation6], %s1155
          %1157 = dma.done %s1153, 256
        $region80: #{tpu_custom_call.1} parent=67 // pred_fallthru
          _
      $region68: #{tpu_custom_call.1} parent=5 // pred_fallthru
        _
    $region6: #{tpu_custom_call.1} parent=1 // loop_footer
      %s27 = sadd.s32 1, %s23
    $region7: #{tpu_custom_call.1} parent=1 // loop_footer_branch
      %22 = sbr.rel target = $region3
    $region8: #{tpu_custom_call.1} parent=1 // loop_exit
      _
    %1158 = vsyncpa [#allocation3], 1
    %s1159 = scalar_lea.sflag [#allocation3], 1
    %1160 = vsyncpa %s1159, 1
    %1161 = vsyncpa [#allocation5], 1
    %s1162 = scalar_lea.sflag [#allocation5], 1
    %1163 = vsyncpa %s1162, 1

// kernel: tpu_custom_call.1
$region0: #{tpu_custom_call.1}
  #allocation0 [shape = 'u32[]', space=smem, size = 0x4, offset = 0x4, fixed_abs, tag = 'smem constant byte address 0x4 - core index']
  #allocation1 [shape = 'u32[144,128]{1,0:T(1,128)}', space=vmem, size = 0x12000, scoped, tag = 'internal scratch']
  %s0 = inlined_call_operand.vmem [shape: bf16[2,16,32], index: 0, kind: input, shape index: {}]
  %s1 = inlined_call_operand.vmem [shape: bf16[32,64], index: 1, kind: input, shape index: {}]
  %s2 = inlined_call_operand.vmem [shape: bf16[32,4], index: 2, kind: input, shape index: {}]
  %s3 = inlined_call_operand.vmem [shape: bf16[4,32], index: 3, kind: input, shape index: {}]
  %s4 = inlined_call_operand.vmem [shape: bf16[2,32,128], index: 4, kind: input, shape index: {}]
  %s5 = inlined_call_operand.vmem [shape: bf16[2,32,128], index: 5, kind: input, shape index: {}]
  %s6 = inlined_call_operand.vmem [shape: bf16[256,32], index: 6, kind: input, shape index: {}]
  %s7 = inlined_call_operand.vmem [shape: f32[1,32], index: 7, kind: input, shape index: {}]
  %s8 = inlined_call_operand.hbm [shape: f32[2,16,32], index: 8, kind: output, shape index: {0}]
  %s9 = inlined_call_operand.hbm [shape: f32[2,16,128], index: 9, kind: output, shape index: {1}]
  %s10 = inlined_call_operand.hbm [shape: f32[2,16,128], index: 10, kind: output, shape index: {2}]
  %11 = xla_tuple %s8, %s9, %s10
  %s12 = sld [smem:[#allocation0]]
  $region81: #{tpu_custom_call.1} parent=0
    _
  %s14 = ssub.s32 1, %s12
  %s15 = scalar_select 0, %s14, %s12
  $region1: #{tpu_custom_call.1} parent=0
    #allocation2 [shape = 'u8[16384]{0}', space=vmem, size = 0x4000, scoped, tag = 'output window, operand 0']
    #allocation3 [shape = 's32[2]{0}', space=sflag, size = 0x8, scoped, tag = 'scoped memory for tpu_custom_call.1']
    #allocation4 [shape = 'u8[16384]{0}', space=vmem, size = 0x4000, scoped, tag = 'output window, operand 1']
    #allocation5 [shape = 's32[2]{0}', space=sflag, size = 0x8, scoped, tag = 'scoped memory for tpu_custom_call.1']
    #allocation6 [shape = 'u8[16384]{0}', space=vmem, size = 0x4000, scoped, tag = 'output window, operand 2']
    %16 = vsyncpa [#allocation3], 0
    %s17 = scalar_lea.sflag [#allocation3], 1
    %18 = vsyncpa %s17, 0
    %19 = vsyncpa [#allocation5], 0
    %s20 = scalar_lea.sflag [#allocation5], 1
    %21 = vsyncpa %s20, 0
    loop: start=0, step=1, limit=4
    $region2: #{tpu_custom_call.1} parent=1 // loop_pre_header
      _
    $region3: #{tpu_custom_call.1} parent=1 // loop_header
      %s23 = sphi 0, %s27
      %p24 = scmp.ge.s32.totalorder %s23, 4
      %s30 = sphi 0, %s42
      %s31 = sphi 0, %s38
      %s32 = sphi 0, %s30
      %s33 = sphi 0, %s31
      %s34 = sphi 0, %s32
      %s35 = sphi 0, %s33
      %s47 = sphi 0, %s49
      %s50 = sphi 0, %s47
      %s51 = sphi 0, %s50
      %s67 = sphi 0, %s51
      %s71 = sphi 0, %s71
      %s73 = sphi 0, %s71
      %s74 = sphi 0, %s73
      %s88 = sphi 0, %s74
      %s92 = sphi 0, %s92
      %s94 = sphi 0, %s92
      %s95 = sphi 0, %s94
      %s109 = sphi 0, %s95
      %s113 = sphi 0, %s113
      %s115 = sphi 0, %s113
      %s116 = sphi 0, %s115
      %s130 = sphi 0, %s116
      %s136 = sphi 0, %s138
      %s139 = sphi 0, %s136
      %s140 = sphi 0, %s139
      %s156 = sphi 0, %s140
      %s162 = sphi 0, %s164
      %s165 = sphi 0, %s162
      %s166 = sphi 0, %s165
      %s182 = sphi 0, %s166
      %s186 = sphi 0, %s186
      %s188 = sphi 0, %s186
      %s189 = sphi 0, %s188
      %s203 = sphi 0, %s189
      %s207 = sphi 0, %s207
      %s209 = sphi 0, %s207
      %s210 = sphi 0, %s209
      %s224 = sphi 0, %s210
      %s232 = sphi 0, %s234
      %s235 = sphi 0, %s232
      %s236 = sphi 0, %s235
      %s252 = sphi 0, %s236
      %s260 = sphi 0, %s262
      %s263 = sphi 0, %s260
      %s264 = sphi 0, %s263
      %s280 = sphi 0, %s264
      %s288 = sphi 0, %s290
      %s291 = sphi 0, %s288
      %s292 = sphi 0, %s291
      %s308 = sphi 0, %s292
    $region4: #{tpu_custom_call.1} parent=1 // loop_header_branch
      %26 = sbr.rel (%p24) target = $region8
    $region5: #{tpu_custom_call.1} parent=1 // loop_body
      %s28 = ssub.s32 %s23, 1
      %s29 = ssub.s32 %s23, 2
      %s36 = sadd.s32 1, %s31
      %p37 = scmp.ge.s32.totalorder %s36, 1
      %s38 = scalar_select %p37, 0, %s36
      %s39 = sadd.s32 1, %s30
      %s40 = scalar_select %p37, %s39, %s30
      %p41 = scmp.ge.s32.totalorder %s40, 2
      %s42 = scalar_select %p41, 0, %s40
      %s43 = ssub.s32 %s30, %s42
      %s44 = ssub.s32 %s31, %s38
      %s45 = sor.u32 %s43, %s44
      %p46 = scmp.eq.s32.totalorder %s45, 0
      %s48 = sadd.s32 %s47, 1
      %s49 = scalar_select %p46, %s47, %s48
      %p52 = pneg %p46
      %p53 = scmp.eq.s32.totalorder %s23, 1
      %p54 = por %p52, %p53
      %p55 = scmp.ne.s32.totalorder %s47, %s50
      %p56 = scmp.eq.s32.totalorder %s23, 0
      %p57 = por %p55, %p56
      %p58 = scmp.ne.s32.totalorder %s47, %s50
      %p59 = scmp.eq.s32.totalorder %s28, 1
      %p60 = por %p58, %p59
      %p61 = scmp.ne.s32.totalorder %s50, %s51
      %p62 = scmp.eq.s32.totalorder %s28, 0
      %p63 = por %p61, %p62
      %p64 = scmp.ne.s32.totalorder %s50, %s51
      %p65 = scmp.eq.s32.totalorder %s29, 1
      %p66 = por %p64, %p65
      %p68 = scmp.ne.s32.totalorder %s51, %s67
      %p69 = scmp.eq.s32.totalorder %s29, 0
      %p70 = por %p68, %p69
      %s72 = sadd.s32 %s71, 1
      %p75 = scmp.eq.s32.totalorder %s23, 1
      %p76 = scmp.ne.s32.totalorder %s71, %s73
      %p77 = scmp.eq.s32.totalorder %s23, 0
      %p78 = por %p76, %p77
      %p79 = scmp.ne.s32.totalorder %s71, %s73
      %p80 = scmp.eq.s32.totalorder %s28, 1
      %p81 = por %p79, %p80
      %p82 = scmp.ne.s32.totalorder %s73, %s74
      %p83 = scmp.eq.s32.totalorder %s28, 0
      %p84 = por %p82, %p83
      %p85 = scmp.ne.s32.totalorder %s73, %s74
      %p86 = scmp.eq.s32.totalorder %s29, 1
      %p87 = por %p85, %p86
      %p89 = scmp.ne.s32.totalorder %s74, %s88
      %p90 = scmp.eq.s32.totalorder %s29, 0
      %p91 = por %p89, %p90
      %s93 = sadd.s32 %s92, 1
      %p96 = scmp.eq.s32.totalorder %s23, 1
      %p97 = scmp.ne.s32.totalorder %s92, %s94
      %p98 = scmp.eq.s32.totalorder %s23, 0
      %p99 = por %p97, %p98
      %p100 = scmp.ne.s32.totalorder %s92, %s94
      %p101 = scmp.eq.s32.totalorder %s28, 1
      %p102 = por %p100, %p101
      %p103 = scmp.ne.s32.totalorder %s94, %s95
      %p104 = scmp.eq.s32.totalorder %s28, 0
      %p105 = por %p103, %p104
      %p106 = scmp.ne.s32.totalorder %s94, %s95
      %p107 = scmp.eq.s32.totalorder %s29, 1
      %p108 = por %p106, %p107
      %p110 = scmp.ne.s32.totalorder %s95, %s109
      %p111 = scmp.eq.s32.totalorder %s29, 0
      %p112 = por %p110, %p111
      %s114 = sadd.s32 %s113, 1
      %p117 = scmp.eq.s32.totalorder %s23, 1
      %p118 = scmp.ne.s32.totalorder %s113, %s115
      %p119 = scmp.eq.s32.totalorder %s23, 0
      %p120 = por %p118, %p119
      %p121 = scmp.ne.s32.totalorder %s113, %s115
      %p122 = scmp.eq.s32.totalorder %s28, 1
      %p123 = por %p121, %p122
      %p124 = scmp.ne.s32.totalorder %s115, %s116
      %p125 = scmp.eq.s32.totalorder %s28, 0
      %p126 = por %p124, %p125
      %p127 = scmp.ne.s32.totalorder %s115, %s116
      %p128 = scmp.eq.s32.totalorder %s29, 1
      %p129 = por %p127, %p128
      %p131 = scmp.ne.s32.totalorder %s116, %s130
      %p132 = scmp.eq.s32.totalorder %s29, 0
      %p133 = por %p131, %p132
      %s134 = ssub.s32 %s30, %s42
      %p135 = scmp.eq.s32.totalorder %s134, 0
      %s137 = sadd.s32 %s136, 1
      %s138 = scalar_select %p135, %s136, %s137
      %p141 = pneg %p135
      %p142 = scmp.eq.s32.totalorder %s23, 1
      %p143 = por %p141, %p142
      %p144 = scmp.ne.s32.totalorder %s136, %s139
      %p145 = scmp.eq.s32.totalorder %s23, 0
      %p146 = por %p144, %p145
      %p147 = scmp.ne.s32.totalorder %s136, %s139
      %p148 = scmp.eq.s32.totalorder %s28, 1
      %p149 = por %p147, %p148
      %p150 = scmp.ne.s32.totalorder %s139, %s140
      %p151 = scmp.eq.s32.totalorder %s28, 0
      %p152 = por %p150, %p151
      %p153 = scmp.ne.s32.totalorder %s139, %s140
      %p154 = scmp.eq.s32.totalorder %s29, 1
      %p155 = por %p153, %p154
      %p157 = scmp.ne.s32.totalorder %s140, %s156
      %p158 = scmp.eq.s32.totalorder %s29, 0
      %p159 = por %p157, %p158
      %s160 = ssub.s32 %s30, %s42
      %p161 = scmp.eq.s32.totalorder %s160, 0
      %s163 = sadd.s32 %s162, 1
      %s164 = scalar_select %p161, %s162, %s163
      %p167 = pneg %p161
      %p168 = scmp.eq.s32.totalorder %s23, 1
      %p169 = por %p167, %p168
      %p170 = scmp.ne.s32.totalorder %s162, %s165
      %p171 = scmp.eq.s32.totalorder %s23, 0
      %p172 = por %p170, %p171
      %p173 = scmp.ne.s32.totalorder %s162, %s165
      %p174 = scmp.eq.s32.totalorder %s28, 1
      %p175 = por %p173, %p174
      %p176 = scmp.ne.s32.totalorder %s165, %s166
      %p177 = scmp.eq.s32.totalorder %s28, 0
      %p178 = por %p176, %p177
      %p179 = scmp.ne.s32.totalorder %s165, %s166
      %p180 = scmp.eq.s32.totalorder %s29, 1
      %p181 = por %p179, %p180
      %p183 = scmp.ne.s32.totalorder %s166, %s182
      %p184 = scmp.eq.s32.totalorder %s29, 0
      %p185 = por %p183, %p184
      %s187 = sadd.s32 %s186, 1
      %p190 = scmp.eq.s32.totalorder %s23, 1
      %p191 = scmp.ne.s32.totalorder %s186, %s188
      %p192 = scmp.eq.s32.totalorder %s23, 0
      %p193 = por %p191, %p192
      %p194 = scmp.ne.s32.totalorder %s186, %s188
      %p195 = scmp.eq.s32.totalorder %s28, 1
      %p196 = por %p194, %p195
      %p197 = scmp.ne.s32.totalorder %s188, %s189
      %p198 = scmp.eq.s32.totalorder %s28, 0
      %p199 = por %p197, %p198
      %p200 = scmp.ne.s32.totalorder %s188, %s189
      %p201 = scmp.eq.s32.totalorder %s29, 1
      %p202 = por %p200, %p201
      %p204 = scmp.ne.s32.totalorder %s189, %s203
      %p205 = scmp.eq.s32.totalorder %s29, 0
      %p206 = por %p204, %p205
      %s208 = sadd.s32 %s207, 1
      %p211 = scmp.eq.s32.totalorder %s23, 1
      %p212 = scmp.ne.s32.totalorder %s207, %s209
      %p213 = scmp.eq.s32.totalorder %s23, 0
      %p214 = por %p212, %p213
      %p215 = scmp.ne.s32.totalorder %s207, %s209
      %p216 = scmp.eq.s32.totalorder %s28, 1
      %p217 = por %p215, %p216
      %p218 = scmp.ne.s32.totalorder %s209, %s210
      %p219 = scmp.eq.s32.totalorder %s28, 0
      %p220 = por %p218, %p219
      %p221 = scmp.ne.s32.totalorder %s209, %s210
      %p222 = scmp.eq.s32.totalorder %s29, 1
      %p223 = por %p221, %p222
      %p225 = scmp.ne.s32.totalorder %s210, %s224
      %p226 = scmp.eq.s32.totalorder %s29, 0
      %p227 = por %p225, %p226
      %s228 = ssub.s32 %s30, %s42
      %s229 = ssub.s32 %s31, %s38
      %s230 = sor.u32 %s228, %s229
      %p231 = scmp.eq.s32.totalorder %s230, 0
      %s233 = sadd.s32 %s232, 1
      %s234 = scalar_select %p231, %s232, %s233
      %p237 = pneg %p231
      %p238 = scmp.eq.s32.totalorder %s23, 1
      %p239 = por %p237, %p238
      %p240 = scmp.ne.s32.totalorder %s232, %s235
      %p241 = scmp.eq.s32.totalorder %s23, 0
      %p242 = por %p240, %p241
      %p243 = scmp.ne.s32.totalorder %s232, %s235
      %p244 = scmp.eq.s32.totalorder %s28, 1
      %p245 = por %p243, %p244
      %p246 = scmp.ne.s32.totalorder %s235, %s236
      %p247 = scmp.eq.s32.totalorder %s28, 0
      %p248 = por %p246, %p247
      %p249 = scmp.ne.s32.totalorder %s235, %s236
      %p250 = scmp.eq.s32.totalorder %s29, 1
      %p251 = por %p249, %p250
      %p253 = scmp.ne.s32.totalorder %s236, %s252
      %p254 = scmp.eq.s32.totalorder %s29, 0
      %p255 = por %p253, %p254
      %s256 = ssub.s32 %s30, %s42
      %s257 = ssub.s32 %s31, %s38
      %s258 = sor.u32 %s256, %s257
      %p259 = scmp.eq.s32.totalorder %s258, 0
      %s261 = sadd.s32 %s260, 1
      %s262 = scalar_select %p259, %s260, %s261
      %p265 = pneg %p259
      %p266 = scmp.eq.s32.totalorder %s23, 1
      %p267 = por %p265, %p266
      %p268 = scmp.ne.s32.totalorder %s260, %s263
      %p269 = scmp.eq.s32.totalorder %s23, 0
      %p270 = por %p268, %p269
      %p271 = scmp.ne.s32.totalorder %s260, %s263
      %p272 = scmp.eq.s32.totalorder %s28, 1
      %p273 = por %p271, %p272
      %p274 = scmp.ne.s32.totalorder %s263, %s264
      %p275 = scmp.eq.s32.totalorder %s28, 0
      %p276 = por %p274, %p275
      %p277 = scmp.ne.s32.totalorder %s263, %s264
      %p278 = scmp.eq.s32.totalorder %s29, 1
      %p279 = por %p277, %p278
      %p281 = scmp.ne.s32.totalorder %s264, %s280
      %p282 = scmp.eq.s32.totalorder %s29, 0
      %p283 = por %p281, %p282
      %s284 = ssub.s32 %s30, %s42
      %s285 = ssub.s32 %s31, %s38
      %s286 = sor.u32 %s284, %s285
      %p287 = scmp.eq.s32.totalorder %s286, 0
      %s289 = sadd.s32 %s288, 1
      %s290 = scalar_select %p287, %s288, %s289
      %p293 = pneg %p287
      %p294 = scmp.eq.s32.totalorder %s23, 1
      %p295 = por %p293, %p294
      %p296 = scmp.ne.s32.totalorder %s288, %s291
      %p297 = scmp.eq.s32.totalorder %s23, 0
      %p298 = por %p296, %p297
      %p299 = scmp.ne.s32.totalorder %s288, %s291
      %p300 = scmp.eq.s32.totalorder %s28, 1
      %p301 = por %p299, %p300
      %p302 = scmp.ne.s32.totalorder %s291, %s292
      %p303 = scmp.eq.s32.totalorder %s28, 0
      %p304 = por %p302, %p303
      %p305 = scmp.ne.s32.totalorder %s291, %s292
      %p306 = scmp.eq.s32.totalorder %s29, 1
      %p307 = por %p305, %p306
      %p309 = scmp.ne.s32.totalorder %s292, %s308
      %p310 = scmp.eq.s32.totalorder %s29, 0
      %p311 = por %p309, %p310
      %p312 = scmp.le.s32.totalorder 1, %s23
      %p313 = scmp.lt.s32.totalorder %s23, 3
      %p314 = pnand %p312, %p313
      %p315 = pneg %p314
      // Predicated region
      $region9: #{tpu_custom_call.1} parent=5 // pred_check
        _
      $region10: #{tpu_custom_call.1} parent=5 // pred_check_branch
        %317 = sbr.rel (%p314) target = $region12
      $region11: #{tpu_custom_call.1} parent=5 // pred_region
        %s318 = ssub.s32 %s23, 1
        // Predicated region
        $region13: #{tpu_custom_call.1} parent=11 // pred_check
          %p319 = pneg %p84
        $region14: #{tpu_custom_call.1} parent=11 // pred_check_branch
          %321 = sbr.rel (%p319) target = $region16
        $region15: #{tpu_custom_call.1} parent=11 // pred_region
          _
        $region16: #{tpu_custom_call.1} parent=11 // pred_fallthru
          _
        // Predicated region
        $region17: #{tpu_custom_call.1} parent=11 // pred_check
          %p322 = pneg %p105
        $region18: #{tpu_custom_call.1} parent=11 // pred_check_branch
          %324 = sbr.rel (%p322) target = $region20
        $region19: #{tpu_custom_call.1} parent=11 // pred_region
          _
        $region20: #{tpu_custom_call.1} parent=11 // pred_fallthru
          _
        // Predicated region
        $region21: #{tpu_custom_call.1} parent=11 // pred_check
          %p325 = pneg %p126
        $region22: #{tpu_custom_call.1} parent=11 // pred_check_branch
          %327 = sbr.rel (%p325) target = $region24
        $region23: #{tpu_custom_call.1} parent=11 // pred_region
          _
        $region24: #{tpu_custom_call.1} parent=11 // pred_fallthru
          _
        // Predicated region
        $region25: #{tpu_custom_call.1} parent=11 // pred_check
          %p328 = pneg %p199
        $region26: #{tpu_custom_call.1} parent=11 // pred_check_branch
          %330 = sbr.rel (%p328) target = $region28
        $region27: #{tpu_custom_call.1} parent=11 // pred_region
          _
        $region28: #{tpu_custom_call.1} parent=11 // pred_fallthru
          _
        // Predicated region
        $region29: #{tpu_custom_call.1} parent=11 // pred_check
          %p331 = pneg %p220
        $region30: #{tpu_custom_call.1} parent=11 // pred_check_branch
          %333 = sbr.rel (%p331) target = $region32
        $region31: #{tpu_custom_call.1} parent=11 // pred_region
          _
        $region32: #{tpu_custom_call.1} parent=11 // pred_fallthru
          _
      $region12: #{tpu_custom_call.1} parent=5 // pred_fallthru
        _
      %p334 = scmp.lt.s32.totalorder %s23, 2
      // Predicated region
      $region33: #{tpu_custom_call.1} parent=5 // pred_check
        %p335 = pneg %p334
      $region34: #{tpu_custom_call.1} parent=5 // pred_check_branch
        %337 = sbr.rel (%p335) target = $region36
      $region35: #{tpu_custom_call.1} parent=5 // pred_region
        // Predicated region
        $region37: #{tpu_custom_call.1} parent=35 // pred_check
          %p338 = pneg %p57
        $region38: #{tpu_custom_call.1} parent=35 // pred_check_branch
          %340 = sbr.rel (%p338) target = $region40
        $region39: #{tpu_custom_call.1} parent=35 // pred_region
          %s341 = smul.u32 2, %s31
          %p342 = scmp.lt.s32.totalorder %s30, 1
          %s343 = scalar_select %p342, %s30, 1
          %p344 = scmp.lt.s32.totalorder %s341, 1
          %s345 = scalar_select %p344, %s341, 1
          %s346 = smul.addr %s343, 2
          %s347 = sadd.s32 %s345, %s346
          %s348 = smul.addr %s347, 4
          %s349 = scalar_lea.vmem %s0, %s348
          %s350 = smul.u32 2, %s31
        $region40: #{tpu_custom_call.1} parent=35 // pred_fallthru
          _
        // Predicated region
        $region41: #{tpu_custom_call.1} parent=35 // pred_check
          %p351 = pneg %p146
        $region42: #{tpu_custom_call.1} parent=35 // pred_check_branch
          %353 = sbr.rel (%p351) target = $region44
        $region43: #{tpu_custom_call.1} parent=35 // pred_region
          %p354 = scmp.lt.s32.totalorder %s30, 1
          %s355 = scalar_select %p354, %s30, 1
          %s356 = smul.addr %s355, 4
          %s357 = smul.addr %s356, 4
          %s358 = scalar_lea.vmem %s4, %s357
        $region44: #{tpu_custom_call.1} parent=35 // pred_fallthru
          _
        // Predicated region
        $region45: #{tpu_custom_call.1} parent=35 // pred_check
          %p359 = pneg %p172
        $region46: #{tpu_custom_call.1} parent=35 // pred_check_branch
          %361 = sbr.rel (%p359) target = $region48
        $region47: #{tpu_custom_call.1} parent=35 // pred_region
          %p362 = scmp.lt.s32.totalorder %s30, 1
          %s363 = scalar_select %p362, %s30, 1
          %s364 = smul.addr %s363, 4
          %s365 = smul.addr %s364, 4
          %s366 = scalar_lea.vmem %s5, %s365
        $region48: #{tpu_custom_call.1} parent=35 // pred_fallthru
          _
      $region36: #{tpu_custom_call.1} parent=5 // pred_fallthru
        _
      %p367 = scmp.le.s32.totalorder 1, %s23
      %p368 = scmp.lt.s32.totalorder %s23, 3
      %p369 = pnand %p367, %p368
      %p370 = pneg %p369
      // Predicated region
      $region49: #{tpu_custom_call.1} parent=5 // pred_check
        _
      $region50: #{tpu_custom_call.1} parent=5 // pred_check_branch
        %372 = sbr.rel (%p369) target = $region52
      $region51: #{tpu_custom_call.1} parent=5 // pred_region
        %s373 = ssub.s32 %s23, 1
        %s374 = smul.u32 2, %s33
        %p375 = scmp.lt.s32.totalorder %s32, 1
        %s376 = scalar_select %p375, %s32, 1
        %p377 = scmp.lt.s32.totalorder %s374, 1
        %s378 = scalar_select %p377, %s374, 1
        %s379 = smul.addr %s376, 2
        %s380 = sadd.s32 %s378, %s379
        %s381 = smul.addr %s380, 4
        %s382 = scalar_lea.vmem %s0, %s381
        %p383 = pneg %p63
        %p384 = pneg %p60
        %p385 = pneg %p84
        %p386 = pneg %p81
        %p387 = pneg %p105
        %p388 = pneg %p102
        %p389 = pneg %p126
        %p390 = pneg %p123
        %p391 = scmp.lt.s32.totalorder %s32, 1
        %s392 = scalar_select %p391, %s32, 1
        %s393 = smul.addr %s392, 4
        %s394 = smul.addr %s393, 4
        %s395 = scalar_lea.vmem %s4, %s394
        %p396 = pneg %p152
        %p397 = pneg %p149
        %p398 = scmp.lt.s32.totalorder %s32, 1
        %s399 = scalar_select %p398, %s32, 1
        %s400 = smul.addr %s399, 4
        %s401 = smul.addr %s400, 4
        %s402 = scalar_lea.vmem %s5, %s401
        %p403 = pneg %p178
        %p404 = pneg %p175
        %p405 = pneg %p199
        %p406 = pneg %p196
        %p407 = pneg %p220
        %p408 = pneg %p217
        %p409 = pneg %p248
        %p410 = pneg %p245
        %s411 = sand.u32 %s235, 1
        %s412 = scalar_lea.sflag [#allocation3], %s411
        %s413 = sand.u32 %s235, 1
        %s414 = smul.addr %s413, 16
        %s415 = scalar_lea.vmem [#allocation2], %s414
        %p416 = pneg %p276
        %p417 = pneg %p273
        %s418 = sand.u32 %s28, 1
        %s419 = scalar_lea.sflag [#allocation5], %s418
        %s420 = sand.u32 %s263, 1
        %s421 = smul.addr %s420, 16
        %s422 = scalar_lea.vmem [#allocation4], %s421
        %p423 = pneg %p304
        %p424 = pneg %p301
        %s425 = sand.u32 %s28, 1
        %s426 = scalar_lea.sflag [#allocation5], %s425
        %s427 = sand.u32 %s291, 1
        %s428 = smul.addr %s427, 16
        %s429 = scalar_lea.vmem [#allocation6], %s428
        %s430 = smul.u32 2, %s33
        %p431 = scmp.lt.s32.totalorder %s32, 1
        %s432 = scalar_select %p431, %s32, 1
        %p433 = scmp.lt.s32.totalorder %s430, 1
        %s434 = scalar_select %p433, %s430, 1
        %s435 = smul.addr %s432, 2
        %s436 = sadd.s32 %s434, %s435
        %s437 = smul.addr %s436, 4
        %s438 = scalar_lea.vmem %s0, %s437
        %s439 = smul.u32 2, %s33
        %p440 = scmp.lt.s32.totalorder %s32, 1
        %s441 = scalar_select %p440, %s32, 1
        %s442 = smul.addr %s441, 4
        %s443 = smul.addr %s442, 4
        %s444 = scalar_lea.vmem %s4, %s443
        %p445 = scmp.lt.s32.totalorder %s32, 1
        %s446 = scalar_select %p445, %s32, 1
        %s447 = smul.addr %s446, 4
        %s448 = smul.addr %s447, 4
        %s449 = scalar_lea.vmem %s5, %s448
        %s450 = smul.u32 2, %s33
        %s451 = smul.u32 2, %s33
        %s452 = smul.u32 2, %s33
        %v454 = vld [vmem:[%s438] sm:$0xf]
        %v455 = vld [vmem:[%s438 + $0x4] sm:$0xf]
        %v456 = vld [vmem:[%s1] sm:$0xf]
        %v457 = vld [vmem:[%s1 + $0x4] sm:$0xf]
        %v458 = vld [vmem:[%s1 + $0x8] sm:$0xf]
        %v459 = vld [vmem:[%s1 + $0xc] sm:$0xf]
        %v462 = vunpack.c.l.b16 %v454
        %v463 = vunpack.c.l.b16 %v455
        %v464 = vpack.c.b16 %v463, %v462
        %v469 = vunpack.c.l.b16 %v456
        %v470 = vunpack.c.l.b16 %v457
        %v471 = vunpack.c.l.b16 %v458
        %v472 = vunpack.c.l.b16 %v459
        %v473 = vpack.c.b16 %v470, %v469
        %v474 = vpack.c.b16 %v472, %v471
        %vm477 = vcmask 261120
        %v479 = vsel %vm477, %v464, 0
        %481 = vmatprep.subr.bf16.mxu0 0
        %482 = vmatpush1.bf16.msra.mxu0 %v473
        %483 = vmatprep.subr.bf16.mxu0 0
        %484 = vmatpush1.bf16.msra.mxu0 %v474
        %485 = vmatprep.subr.bf16.mxu0 0
        %486 = vmatpush1.bf16.msra.mxu0 0
        %487 = vmatprep.subr.bf16.mxu0 0
        %488 = vmatpush1.bf16.msra.mxu0 0
        %489 = vmatprep.subr.bf16.mxu0 0
        %490 = vmatpush1.bf16.msra.mxu0 0
        %491 = vmatprep.subr.bf16.mxu0 0
        %492 = vmatpush1.bf16.msra.mxu0 0
        %493 = vmatprep.subr.bf16.mxu0 0
        %494 = vmatpush1.bf16.msra.mxu0 0
        %495 = vmatprep.subr.bf16.mxu0 0
        %496 = vmatpush1.bf16.msra.mxu0 0
        %497 = vmatprep.subr.bf16.mxu0 0
        %498 = vmatpush1.bf16.msra.mxu0 0
        %499 = vmatprep.subr.bf16.mxu0 0
        %500 = vmatpush1.bf16.msra.mxu0 0
        %501 = vmatprep.subr.bf16.mxu0 0
        %502 = vmatpush1.bf16.msra.mxu0 0
        %503 = vmatprep.subr.bf16.mxu0 0
        %504 = vmatpush1.bf16.msra.mxu0 0
        %505 = vmatprep.subr.bf16.mxu0 0
        %506 = vmatpush1.bf16.msra.mxu0 0
        %507 = vmatprep.subr.bf16.mxu0 0
        %508 = vmatpush1.bf16.msra.mxu0 0
        %509 = vmatprep.subr.bf16.mxu0 0
        %510 = vmatpush1.bf16.msra.mxu0 0
        %511 = vmatprep.subr.bf16.mxu0 0
        %512 = vmatpush1.bf16.msra.mxu0 0
        %513 = vmatprep.mubr.bf16.mxu0 0
        %514 = vmatmul.mubr.bf16.gmra.mrb[0].mxu0 %v479
        %v515 = vpop.f32.mrb[0].mxu0
        %v516 = vadd.f32 0.0, %v515
        %v517 = vpop.f32.mrb[0].mxu0
        %v518 = vpop.f32.mrb[0].mxu0
        %v519 = vadd.f32 0.0, %v518
        %v520 = vpop.f32.mrb[0].mxu0
        %521 = vdwg.mxu0
        %v522 = vld [vmem:[%s2] sm:$0xf]
        %v523 = vld [vmem:[%s2 + $0x4] sm:$0xf]
        %v524 = vld [vmem:[%s2 + $0x8] sm:$0xf]
        %v525 = vld [vmem:[%s2 + $0xc] sm:$0xf]
        %v526 = vld [vmem:[%s3] sm:$0x3]
        %v527 = vmul.f32 %v516, %v516
        %v528 = vmul.f32 %v519, %v519
        %v529 = vpack.c.bf16 %v528, %v527
        %v534 = vunpack.c.l.b16 %v522
        %v535 = vunpack.c.l.b16 %v523
        %v536 = vunpack.c.l.b16 %v524
        %v537 = vunpack.c.l.b16 %v525
        %v538 = vpack.c.b16 %v535, %v534
        %v539 = vpack.c.b16 %v537, %v536
        %v543 = vsel %vm477, %v529, 0
        %545 = vmatprep.subr.bf16.mxu0 0
        %546 = vmatpush1.bf16.msra.mxu0 %v538
        %547 = vmatprep.subr.bf16.mxu0 0
        %548 = vmatpush1.bf16.msra.mxu0 %v539
        %549 = vmatprep.subr.bf16.mxu0 0
        %550 = vmatpush1.bf16.msra.mxu0 0
        %551 = vmatprep.subr.bf16.mxu0 0
        %552 = vmatpush1.bf16.msra.mxu0 0
        %553 = vmatprep.subr.bf16.mxu0 0
        %554 = vmatpush1.bf16.msra.mxu0 0
        %555 = vmatprep.subr.bf16.mxu0 0
        %556 = vmatpush1.bf16.msra.mxu0 0
        %557 = vmatprep.subr.bf16.mxu0 0
        %558 = vmatpush1.bf16.msra.mxu0 0
        %559 = vmatprep.subr.bf16.mxu0 0
        %560 = vmatpush1.bf16.msra.mxu0 0
        %561 = vmatprep.subr.bf16.mxu0 0
        %562 = vmatpush1.bf16.msra.mxu0 0
        %563 = vmatprep.subr.bf16.mxu0 0
        %564 = vmatpush1.bf16.msra.mxu0 0
        %565 = vmatprep.subr.bf16.mxu0 0
        %566 = vmatpush1.bf16.msra.mxu0 0
        %567 = vmatprep.subr.bf16.mxu0 0
        %568 = vmatpush1.bf16.msra.mxu0 0
        %569 = vmatprep.subr.bf16.mxu0 0
        %570 = vmatpush1.bf16.msra.mxu0 0
        %571 = vmatprep.subr.bf16.mxu0 0
        %572 = vmatpush1.bf16.msra.mxu0 0
        %573 = vmatprep.subr.bf16.mxu0 0
        %574 = vmatpush1.bf16.msra.mxu0 0
        %575 = vmatprep.subr.bf16.mxu0 0
        %576 = vmatpush1.bf16.msra.mxu0 0
        %577 = vmatprep.mubr.bf16.mxu0 0
        %578 = vmatmul.mubr.bf16.gmra.mrb[0].mxu0 %v543
        %v579 = vpop.f32.mrb[0].mxu0
        %v580 = vadd.f32 0.0, %v579
        %v581 = vpop.f32.mrb[0].mxu0
        %v582 = vpop.f32.mrb[0].mxu0
        %v583 = vadd.f32 0.0, %v582
        %v584 = vpop.f32.mrb[0].mxu0
        %585 = vdwg.mxu0
        %v586 = vmax.f32 %v580, 1e-24
        %v587 = vmax.f32 %v583, 1e-24
        %v588 = vrsqrt.pop %v586
        %v589 = vrsqrt.pop %v587
        %v590 = vpack.c.bf16 %v589, %v588
        %vm591 = vcmask 31744
        %v593 = vsel %vm591, %v590, 0
        %vm595 = vcmask 1041408
        %v597 = vsel %vm595, %v526, 0
        %599 = vmatprep.subr.bf16.mxu0 0
        %600 = vmatpush1.bf16.msra.mxu0 %v597
        %601 = vmatprep.subr.bf16.mxu0 0
        %602 = vmatpush1.bf16.msra.mxu0 0
        %603 = vmatprep.subr.bf16.mxu0 0
        %604 = vmatpush1.bf16.msra.mxu0 0
        %605 = vmatprep.subr.bf16.mxu0 0
        %606 = vmatpush1.bf16.msra.mxu0 0
        %607 = vmatprep.subr.bf16.mxu0 0
        %608 = vmatpush1.bf16.msra.mxu0 0
        %609 = vmatprep.subr.bf16.mxu0 0
        %610 = vmatpush1.bf16.msra.mxu0 0
        %611 = vmatprep.subr.bf16.mxu0 0
        %612 = vmatpush1.bf16.msra.mxu0 0
        %613 = vmatprep.subr.bf16.mxu0 0
        %614 = vmatpush1.bf16.msra.mxu0 0
        %615 = vmatprep.subr.bf16.mxu0 0
        %616 = vmatpush1.bf16.msra.mxu0 0
        %617 = vmatprep.subr.bf16.mxu0 0
        %618 = vmatpush1.bf16.msra.mxu0 0
        %619 = vmatprep.subr.bf16.mxu0 0
        %620 = vmatpush1.bf16.msra.mxu0 0
        %621 = vmatprep.subr.bf16.mxu0 0
        %622 = vmatpush1.bf16.msra.mxu0 0
        %623 = vmatprep.subr.bf16.mxu0 0
        %624 = vmatpush1.bf16.msra.mxu0 0
        %625 = vmatprep.subr.bf16.mxu0 0
        %626 = vmatpush1.bf16.msra.mxu0 0
        %627 = vmatprep.subr.bf16.mxu0 0
        %628 = vmatpush1.bf16.msra.mxu0 0
        %629 = vmatprep.subr.bf16.mxu0 0
        %630 = vmatpush1.bf16.msra.mxu0 0
        %631 = vmatprep.mubr.bf16.mxu0 0
        %632 = vmatmul.mubr.bf16.gmra.mrb[0].mxu0 %v593
        %v633 = vpop.f32.mrb[0].mxu0
        %v634 = vadd.f32 0.0, %v633
        %v635 = vpop.f32.mrb[0].mxu0
        %v636 = vpop.f32.mrb[0].mxu0
        %v637 = vadd.f32 0.0, %v636
        %v638 = vpop.f32.mrb[0].mxu0
        %639 = vdwg.mxu0
        %v640 = vmul.f32 %v516, %v634
        %v641 = vmul.f32 %v519, %v637
        %v642 = vpack.c.bf16 %v641, %v640
        %644 = vrot.lane.b32.xlu0 %v529, 96
        %v645 = vpop.permute.xlu0 %644
        %v647 = vsel %vm477, %v645, 0
        %649 = vmatprep.subr.bf16.mxu0 0
        %650 = vmatpush1.bf16.msra.mxu0 %v538
        %651 = vmatprep.subr.bf16.mxu0 0
        %652 = vmatpush1.bf16.msra.mxu0 %v539
        %653 = vmatprep.subr.bf16.mxu0 0
        %654 = vmatpush1.bf16.msra.mxu0 0
        %655 = vmatprep.subr.bf16.mxu0 0
        %656 = vmatpush1.bf16.msra.mxu0 0
        %657 = vmatprep.subr.bf16.mxu0 0
        %658 = vmatpush1.bf16.msra.mxu0 0
        %659 = vmatprep.subr.bf16.mxu0 0
        %660 = vmatpush1.bf16.msra.mxu0 0
        %661 = vmatprep.subr.bf16.mxu0 0
        %662 = vmatpush1.bf16.msra.mxu0 0
        %663 = vmatprep.subr.bf16.mxu0 0
        %664 = vmatpush1.bf16.msra.mxu0 0
        %665 = vmatprep.subr.bf16.mxu0 0
        %666 = vmatpush1.bf16.msra.mxu0 0
        %667 = vmatprep.subr.bf16.mxu0 0
        %668 = vmatpush1.bf16.msra.mxu0 0
        %669 = vmatprep.subr.bf16.mxu0 0
        %670 = vmatpush1.bf16.msra.mxu0 0
        %671 = vmatprep.subr.bf16.mxu0 0
        %672 = vmatpush1.bf16.msra.mxu0 0
        %673 = vmatprep.subr.bf16.mxu0 0
        %674 = vmatpush1.bf16.msra.mxu0 0
        %675 = vmatprep.subr.bf16.mxu0 0
        %676 = vmatpush1.bf16.msra.mxu0 0
        %677 = vmatprep.subr.bf16.mxu0 0
        %678 = vmatpush1.bf16.msra.mxu0 0
        %679 = vmatprep.subr.bf16.mxu0 0
        %680 = vmatpush1.bf16.msra.mxu0 0
        %681 = vmatprep.mubr.bf16.mxu0 0
        %682 = vmatmul.mubr.bf16.gmra.mrb[0].mxu0 %v647
        %v683 = vpop.f32.mrb[0].mxu0
        %v684 = vadd.f32 0.0, %v683
        %v685 = vpop.f32.mrb[0].mxu0
        %v686 = vpop.f32.mrb[0].mxu0
        %v687 = vadd.f32 0.0, %v686
        %v688 = vpop.f32.mrb[0].mxu0
        %689 = vdwg.mxu0
        %v690 = vmax.f32 %v684, 1e-24
        %v691 = vmax.f32 %v687, 1e-24
        %v692 = vrsqrt.pop %v690
        %v693 = vrsqrt.pop %v691
        %v694 = vpack.c.bf16 %v693, %v692
        %v696 = vsel %vm591, %v694, 0
        %698 = vmatprep.subr.bf16.mxu0 0
        %699 = vmatpush1.bf16.msra.mxu0 %v597
        %700 = vmatprep.subr.bf16.mxu0 0
        %701 = vmatpush1.bf16.msra.mxu0 0
        %702 = vmatprep.subr.bf16.mxu0 0
        %703 = vmatpush1.bf16.msra.mxu0 0
        %704 = vmatprep.subr.bf16.mxu0 0
        %705 = vmatpush1.bf16.msra.mxu0 0
        %706 = vmatprep.subr.bf16.mxu0 0
        %707 = vmatpush1.bf16.msra.mxu0 0
        %708 = vmatprep.subr.bf16.mxu0 0
        %709 = vmatpush1.bf16.msra.mxu0 0
        %710 = vmatprep.subr.bf16.mxu0 0
        %711 = vmatpush1.bf16.msra.mxu0 0
        %712 = vmatprep.subr.bf16.mxu0 0
        %713 = vmatpush1.bf16.msra.mxu0 0
        %714 = vmatprep.subr.bf16.mxu0 0
        %715 = vmatpush1.bf16.msra.mxu0 0
        %716 = vmatprep.subr.bf16.mxu0 0
        %717 = vmatpush1.bf16.msra.mxu0 0
        %718 = vmatprep.subr.bf16.mxu0 0
        %719 = vmatpush1.bf16.msra.mxu0 0
        %720 = vmatprep.subr.bf16.mxu0 0
        %721 = vmatpush1.bf16.msra.mxu0 0
        %722 = vmatprep.subr.bf16.mxu0 0
        %723 = vmatpush1.bf16.msra.mxu0 0
        %724 = vmatprep.subr.bf16.mxu0 0
        %725 = vmatpush1.bf16.msra.mxu0 0
        %726 = vmatprep.subr.bf16.mxu0 0
        %727 = vmatpush1.bf16.msra.mxu0 0
        %728 = vmatprep.subr.bf16.mxu0 0
        %729 = vmatpush1.bf16.msra.mxu0 0
        %730 = vmatprep.mubr.bf16.mxu0 0
        %731 = vmatmul.mubr.bf16.gmra.mrb[0].mxu0 %v696
        %v732 = vpop.f32.mrb[0].mxu0
        %v733 = vadd.f32 0.0, %v732
        %v734 = vpop.f32.mrb[0].mxu0
        %v735 = vpop.f32.mrb[0].mxu0
        %v736 = vadd.f32 0.0, %v735
        %v737 = vpop.f32.mrb[0].mxu0
        %738 = vdwg.mxu0
        %741 = vrot.lane.b32.xlu0 %v733, 32
        %v742 = vpop.permute.xlu0 %741
        %743 = vrot.lane.b32.xlu0 %v736, 32
        %v744 = vpop.permute.xlu0 %743
        %v747 = vmul.f32 %v516, %v742
        %v748 = vmul.f32 %v519, %v744
        %v749 = vpack.c.bf16 %v748, %v747
        %v750 = vld [vmem:[%s444] sm:$0xf]
        %v751 = vld [vmem:[%s444 + $0x4] sm:$0xf]
        %v752 = vld [vmem:[%s444 + $0x8] sm:$0xf]
        %v753 = vld [vmem:[%s444 + $0xc] sm:$0xf]
        %v758 = vunpack.c.l.b16 %v750
        %v759 = vunpack.c.l.b16 %v751
        %v760 = vunpack.c.l.b16 %v752
        %v761 = vunpack.c.l.b16 %v753
        %v762 = vpack.c.b16 %v759, %v758
        %v763 = vpack.c.b16 %v761, %v760
        %v767 = vsel %vm477, %v642, 0
        %769 = vmatprep.subr.bf16.mxu0 0
        %770 = vmatpush1.bf16.msra.mxu0 %v762
        %771 = vmatprep.subr.bf16.mxu0 0
        %772 = vmatpush1.bf16.msra.mxu0 %v763
        %773 = vmatprep.subr.bf16.mxu0 0
        %774 = vmatpush1.bf16.msra.mxu0 0
        %775 = vmatprep.subr.bf16.mxu0 0
        %776 = vmatpush1.bf16.msra.mxu0 0
        %777 = vmatprep.subr.bf16.mxu0 0
        %778 = vmatpush1.bf16.msra.mxu0 0
        %779 = vmatprep.subr.bf16.mxu0 0
        %780 = vmatpush1.bf16.msra.mxu0 0
        %781 = vmatprep.subr.bf16.mxu0 0
        %782 = vmatpush1.bf16.msra.mxu0 0
        %783 = vmatprep.subr.bf16.mxu0 0
        %784 = vmatpush1.bf16.msra.mxu0 0
        %785 = vmatprep.subr.bf16.mxu0 0
        %786 = vmatpush1.bf16.msra.mxu0 0
        %787 = vmatprep.subr.bf16.mxu0 0
        %788 = vmatpush1.bf16.msra.mxu0 0
        %789 = vmatprep.subr.bf16.mxu0 0
        %790 = vmatpush1.bf16.msra.mxu0 0
        %791 = vmatprep.subr.bf16.mxu0 0
        %792 = vmatpush1.bf16.msra.mxu0 0
        %793 = vmatprep.subr.bf16.mxu0 0
        %794 = vmatpush1.bf16.msra.mxu0 0
        %795 = vmatprep.subr.bf16.mxu0 0
        %796 = vmatpush1.bf16.msra.mxu0 0
        %797 = vmatprep.subr.bf16.mxu0 0
        %798 = vmatpush1.bf16.msra.mxu0 0
        %799 = vmatprep.subr.bf16.mxu0 0
        %800 = vmatpush1.bf16.msra.mxu0 0
        %801 = vmatprep.mubr.bf16.mxu0 0
        %802 = vmatmul.mubr.bf16.gmra.mrb[0].mxu0 %v767
        %v803 = vpop.f32.mrb[0].mxu0
        %v804 = vadd.f32 0.0, %v803
        %v805 = vpop.f32.mrb[0].mxu0
        %v806 = vpop.f32.mrb[0].mxu0
        %v807 = vadd.f32 0.0, %v806
        %v808 = vpop.f32.mrb[0].mxu0
        %809 = vdwg.mxu0
        %v810 = vld [vmem:[%s449] sm:$0xf]
        %v811 = vld [vmem:[%s449 + $0x4] sm:$0xf]
        %v812 = vld [vmem:[%s449 + $0x8] sm:$0xf]
        %v813 = vld [vmem:[%s449 + $0xc] sm:$0xf]
        %815 = vrot.lane.b32.xlu0 %v749, 96
        %v816 = vpop.permute.xlu0 %815
        %v821 = vunpack.c.l.b16 %v810
        %v822 = vunpack.c.l.b16 %v811
        %v823 = vunpack.c.l.b16 %v812
        %v824 = vunpack.c.l.b16 %v813
        %v825 = vpack.c.b16 %v822, %v821
        %v826 = vpack.c.b16 %v824, %v823
        %v830 = vsel %vm477, %v816, 0
        %832 = vmatprep.subr.bf16.mxu0 0
        %833 = vmatpush1.bf16.msra.mxu0 %v825
        %834 = vmatprep.subr.bf16.mxu0 0
        %835 = vmatpush1.bf16.msra.mxu0 %v826
        %836 = vmatprep.subr.bf16.mxu0 0
        %837 = vmatpush1.bf16.msra.mxu0 0
        %838 = vmatprep.subr.bf16.mxu0 0
        %839 = vmatpush1.bf16.msra.mxu0 0
        %840 = vmatprep.subr.bf16.mxu0 0
        %841 = vmatpush1.bf16.msra.mxu0 0
        %842 = vmatprep.subr.bf16.mxu0 0
        %843 = vmatpush1.bf16.msra.mxu0 0
        %844 = vmatprep.subr.bf16.mxu0 0
        %845 = vmatpush1.bf16.msra.mxu0 0
        %846 = vmatprep.subr.bf16.mxu0 0
        %847 = vmatpush1.bf16.msra.mxu0 0
        %848 = vmatprep.subr.bf16.mxu0 0
        %849 = vmatpush1.bf16.msra.mxu0 0
        %850 = vmatprep.subr.bf16.mxu0 0
        %851 = vmatpush1.bf16.msra.mxu0 0
        %852 = vmatprep.subr.bf16.mxu0 0
        %853 = vmatpush1.bf16.msra.mxu0 0
        %854 = vmatprep.subr.bf16.mxu0 0
        %855 = vmatpush1.bf16.msra.mxu0 0
        %856 = vmatprep.subr.bf16.mxu0 0
        %857 = vmatpush1.bf16.msra.mxu0 0
        %858 = vmatprep.subr.bf16.mxu0 0
        %859 = vmatpush1.bf16.msra.mxu0 0
        %860 = vmatprep.subr.bf16.mxu0 0
        %861 = vmatpush1.bf16.msra.mxu0 0
        %862 = vmatprep.subr.bf16.mxu0 0
        %863 = vmatpush1.bf16.msra.mxu0 0
        %864 = vmatprep.mubr.bf16.mxu0 0
        %865 = vmatmul.mubr.bf16.gmra.mrb[0].mxu0 %v830
        %v866 = vpop.f32.mrb[0].mxu0
        %v867 = vadd.f32 0.0, %v866
        %v868 = vpop.f32.mrb[0].mxu0
        %v869 = vpop.f32.mrb[0].mxu0
        %v870 = vadd.f32 0.0, %v869
        %v871 = vpop.f32.mrb[0].mxu0
        %872 = vdwg.mxu0
        %873 = vst [vmem:[%s422] sm:$0xff] %v804
        %874 = vst [vmem:[%s422 + $0x8] sm:$0xff] %v807
        %875 = vst [vmem:[%s429] sm:$0xff] %v867
        %876 = vst [vmem:[%s429 + $0x8] sm:$0xff] %v870
        %v877 = vpack.c.bf16 %v807, %v804
        %v878 = vpack.c.bf16 %v870, %v867
        %v879 = vld [vmem:[%s6] sm:$0xf]
        %v880 = vld [vmem:[%s6 + $0x4] sm:$0xf]
        %v881 = vld [vmem:[%s6 + $0x8] sm:$0xf]
        %v882 = vld [vmem:[%s6 + $0xc] sm:$0xf]
        %v883 = vld [vmem:[%s6 + $0x10] sm:$0xf]
        %v884 = vld [vmem:[%s6 + $0x14] sm:$0xf]
        %v885 = vld [vmem:[%s6 + $0x18] sm:$0xf]
        %v886 = vld [vmem:[%s6 + $0x1c] sm:$0xf]
        %v887 = vld [vmem:[%s6 + $0x20] sm:$0xf]
        %v888 = vld [vmem:[%s6 + $0x24] sm:$0xf]
        %v889 = vld [vmem:[%s6 + $0x28] sm:$0xf]
        %v890 = vld [vmem:[%s6 + $0x2c] sm:$0xf]
        %v891 = vld [vmem:[%s6 + $0x30] sm:$0xf]
        %v892 = vld [vmem:[%s6 + $0x34] sm:$0xf]
        %v893 = vld [vmem:[%s6 + $0x38] sm:$0xf]
        %v894 = vld [vmem:[%s6 + $0x3c] sm:$0xf]
        %v895 = vld [vmem:[%s6 + $0x40] sm:$0xf]
        %v896 = vld [vmem:[%s6 + $0x44] sm:$0xf]
        %v897 = vld [vmem:[%s6 + $0x48] sm:$0xf]
        %v898 = vld [vmem:[%s6 + $0x4c] sm:$0xf]
        %v899 = vld [vmem:[%s6 + $0x50] sm:$0xf]
        %v900 = vld [vmem:[%s6 + $0x54] sm:$0xf]
        %v901 = vld [vmem:[%s6 + $0x58] sm:$0xf]
        %v902 = vld [vmem:[%s6 + $0x5c] sm:$0xf]
        %v903 = vld [vmem:[%s6 + $0x60] sm:$0xf]
        %v904 = vld [vmem:[%s6 + $0x64] sm:$0xf]
        %v905 = vld [vmem:[%s6 + $0x68] sm:$0xf]
        %v906 = vld [vmem:[%s6 + $0x6c] sm:$0xf]
        %v907 = vld [vmem:[%s6 + $0x70] sm:$0xf]
        %v908 = vld [vmem:[%s6 + $0x74] sm:$0xf]
        %v909 = vld [vmem:[%s6 + $0x78] sm:$0xf]
        %v910 = vld [vmem:[%s6 + $0x7c] sm:$0xf]
        %v911 = vld [vmem:[%s7] sm:$0x1]
        %v913 = vlaneseq
        %v914 = vshrl.u32 %v913, 7
        %v915 = vsub.s32 0, %v914
        %v916 = vrot.slane %v911, %v915
        %v950 = vunpack.c.l.b16 %v879
        %v951 = vunpack.c.l.b16 %v880
        %v952 = vunpack.c.l.b16 %v881
        %v953 = vunpack.c.l.b16 %v882
        %v954 = vunpack.c.l.b16 %v883
        %v955 = vunpack.c.l.b16 %v884
        %v956 = vunpack.c.l.b16 %v885
        %v957 = vunpack.c.l.b16 %v886
        %v958 = vunpack.c.l.b16 %v887
        %v959 = vunpack.c.l.b16 %v888
        %v960 = vunpack.c.l.b16 %v889
        %v961 = vunpack.c.l.b16 %v890
        %v962 = vunpack.c.l.b16 %v891
        %v963 = vunpack.c.l.b16 %v892
        %v964 = vunpack.c.l.b16 %v893
        %v965 = vunpack.c.l.b16 %v894
        %v966 = vunpack.c.l.b16 %v895
        %v967 = vunpack.c.l.b16 %v896
        %v968 = vunpack.c.l.b16 %v897
        %v969 = vunpack.c.l.b16 %v898
        %v970 = vunpack.c.l.b16 %v899
        %v971 = vunpack.c.l.b16 %v900
        %v972 = vunpack.c.l.b16 %v901
        %v973 = vunpack.c.l.b16 %v902
        %v974 = vunpack.c.l.b16 %v903
        %v975 = vunpack.c.l.b16 %v904
        %v976 = vunpack.c.l.b16 %v905
        %v977 = vunpack.c.l.b16 %v906
        %v978 = vunpack.c.l.b16 %v907
        %v979 = vunpack.c.l.b16 %v908
        %v980 = vunpack.c.l.b16 %v909
        %v981 = vunpack.c.l.b16 %v910
        %v982 = vpack.c.b16 %v951, %v950
        %v983 = vpack.c.b16 %v953, %v952
        %v984 = vpack.c.b16 %v955, %v954
        %v985 = vpack.c.b16 %v957, %v956
        %v986 = vpack.c.b16 %v959, %v958
        %v987 = vpack.c.b16 %v961, %v960
        %v988 = vpack.c.b16 %v963, %v962
        %v989 = vpack.c.b16 %v965, %v964
        %v990 = vpack.c.b16 %v967, %v966
        %v991 = vpack.c.b16 %v969, %v968
        %v992 = vpack.c.b16 %v971, %v970
        %v993 = vpack.c.b16 %v973, %v972
        %v994 = vpack.c.b16 %v975, %v974
        %v995 = vpack.c.b16 %v977, %v976
        %v996 = vpack.c.b16 %v979, %v978
        %v997 = vpack.c.b16 %v981, %v980
        %1014 = vmatprep.subr.bf16.mxu0 0
        %1015 = vmatpush1.bf16.msra.mxu0 %v982
        %1016 = vmatprep.subr.bf16.mxu0 0
        %1017 = vmatpush1.bf16.msra.mxu0 %v983
        %1018 = vmatprep.subr.bf16.mxu0 0
        %1019 = vmatpush1.bf16.msra.mxu0 %v984
        %1020 = vmatprep.subr.bf16.mxu0 0
        %1021 = vmatpush1.bf16.msra.mxu0 %v985
        %1022 = vmatprep.subr.bf16.mxu0 0
        %1023 = vmatpush1.bf16.msra.mxu0 %v986
        %1024 = vmatprep.subr.bf16.mxu0 0
        %1025 = vmatpush1.bf16.msra.mxu0 %v987
        %1026 = vmatprep.subr.bf16.mxu0 0
        %1027 = vmatpush1.bf16.msra.mxu0 %v988
        %1028 = vmatprep.subr.bf16.mxu0 0
        %1029 = vmatpush1.bf16.msra.mxu0 %v989
        %1030 = vmatprep.subr.bf16.mxu0 0
        %1031 = vmatpush1.bf16.msra.mxu0 %v990
        %1032 = vmatprep.subr.bf16.mxu0 0
        %1033 = vmatpush1.bf16.msra.mxu0 %v991
        %1034 = vmatprep.subr.bf16.mxu0 0
        %1035 = vmatpush1.bf16.msra.mxu0 %v992
        %1036 = vmatprep.subr.bf16.mxu0 0
        %1037 = vmatpush1.bf16.msra.mxu0 %v993
        %1038 = vmatprep.subr.bf16.mxu0 0
        %1039 = vmatpush1.bf16.msra.mxu0 %v994
        %1040 = vmatprep.subr.bf16.mxu0 0
        %1041 = vmatpush1.bf16.msra.mxu0 %v995
        %1042 = vmatprep.subr.bf16.mxu0 0
        %1043 = vmatpush1.bf16.msra.mxu0 %v996
        %1044 = vmatprep.subr.bf16.mxu0 0
        %1045 = vmatpush1.bf16.msra.mxu0 %v997
        %1046 = vmatprep.mubr.bf16.mxu0 %v878
        %1047 = vmatmul.mubr.bf16.gmra.mrb[0].mxu0 %v877
        %v1048 = vpop.f32.mrb[0].mxu0
        %v1049 = vadd.f32 %v916, %v1048
        %v1050 = vpop.f32.mrb[0].mxu0
        %v1051 = vpop.f32.mrb[0].mxu0
        %v1052 = vadd.f32 %v916, %v1051
        %v1053 = vpop.f32.mrb[0].mxu0
        %1054 = vdwg.mxu0
        %1055 = vst.msk [vmem:[%s415] sm:$0xff] %vm477, %v1049
        %1056 = vst.msk [vmem:[%s415 + $0x8] sm:$0xff] %vm477, %v1052
        %s1057 = sand.u32 %s235, 1
        %s1058 = scalar_lea.sflag [#allocation3], %s1057
        %s1059 = sand.u32 %s235, 1
        %s1060 = smul.addr %s1059, 16
        %s1061 = scalar_lea.vmem [#allocation2], %s1060
        %s1062 = sand.u32 %s28, 1
        %s1063 = scalar_lea.sflag [#allocation5], %s1062
        %s1064 = sand.u32 %s263, 1
        %s1065 = smul.addr %s1064, 16
        %s1066 = scalar_lea.vmem [#allocation4], %s1065
        %s1067 = sand.u32 %s28, 1
        %s1068 = scalar_lea.sflag [#allocation5], %s1067
        %s1069 = sand.u32 %s291, 1
        %s1070 = smul.addr %s1069, 16
        %s1071 = scalar_lea.vmem [#allocation6], %s1070
        // Predicated region
        $region53: #{tpu_custom_call.1} parent=51 // pred_check
          %p1072 = pneg %p245
        $region54: #{tpu_custom_call.1} parent=51 // pred_check_branch
          %1074 = sbr.rel (%p1072) target = $region56
        $region55: #{tpu_custom_call.1} parent=51 // pred_region
          %s1075 = smul.u32 2, %s33
          %s1077 = ssub.s32 256, 256
          %1078 = vsyncadd %s1058, %s1077
          %s1079 = smul.addr %s32, 2
          %s1080 = sadd.s32 %s1075, %s1079
          %s1081 = smul.addr %s1080, 128
          %s1082 = scalar_lea.hbm %s8, %s1081
          %s1083 = sshll.u32 %s1061, 4
          %s1084 = int_to_ptr.vmem [resolvable:$true] %s1083
          %1089 = dma.vmem_to_hbm [thread:$0]  %s1084, 256, %s1082, %s1058, 128, 128, 8
        $region56: #{tpu_custom_call.1} parent=51 // pred_fallthru
          _
        // Predicated region
        $region57: #{tpu_custom_call.1} parent=51 // pred_check
          %p1090 = pneg %p273
        $region58: #{tpu_custom_call.1} parent=51 // pred_check_branch
          %1092 = sbr.rel (%p1090) target = $region60
        $region59: #{tpu_custom_call.1} parent=51 // pred_region
          %s1093 = smul.u32 2, %s33
          %s1095 = ssub.s32 256, 256
          %1096 = vsyncadd %s1063, %s1095
          %s1097 = smul.addr %s32, 2
          %s1098 = sadd.s32 %s1093, %s1097
          %s1099 = smul.addr %s1098, 128
          %s1100 = scalar_lea.hbm %s9, %s1099
          %s1101 = sshll.u32 %s1066, 4
          %s1102 = int_to_ptr.vmem [resolvable:$true] %s1101
          %1107 = dma.vmem_to_hbm [thread:$0]  %s1102, 256, %s1100, %s1063, 128, 128, 8
        $region60: #{tpu_custom_call.1} parent=51 // pred_fallthru
          _
        // Predicated region
        $region61: #{tpu_custom_call.1} parent=51 // pred_check
          %p1108 = pneg %p301
        $region62: #{tpu_custom_call.1} parent=51 // pred_check_branch
          %1110 = sbr.rel (%p1108) target = $region64
        $region63: #{tpu_custom_call.1} parent=51 // pred_region
          %s1111 = smul.u32 2, %s33
          %s1113 = ssub.s32 256, 256
          %1114 = vsyncadd %s1068, %s1113
          %s1115 = smul.addr %s32, 2
          %s1116 = sadd.s32 %s1111, %s1115
          %s1117 = smul.addr %s1116, 128
          %s1118 = scalar_lea.hbm %s10, %s1117
          %s1119 = sshll.u32 %s1071, 4
          %s1120 = int_to_ptr.vmem [resolvable:$true] %s1119
          %1125 = dma.vmem_to_hbm [thread:$0]  %s1120, 256, %s1118, %s1068, 128, 128, 8
        $region64: #{tpu_custom_call.1} parent=51 // pred_fallthru
          _
      $region52: #{tpu_custom_call.1} parent=5 // pred_fallthru
        _
      %p1126 = scmp.le.s32.totalorder 2, %s23
      // Predicated region
      $region65: #{tpu_custom_call.1} parent=5 // pred_check
        %p1127 = pneg %p1126
      $region66: #{tpu_custom_call.1} parent=5 // pred_check_branch
        %1129 = sbr.rel (%p1127) target = $region68
      $region67: #{tpu_custom_call.1} parent=5 // pred_region
        %s1130 = ssub.s32 %s23, 2
        // Predicated region
        $region69: #{tpu_custom_call.1} parent=67 // pred_check
          %p1131 = pneg %p251
        $region70: #{tpu_custom_call.1} parent=67 // pred_check_branch
          %1133 = sbr.rel (%p1131) target = $region72
        $region71: #{tpu_custom_call.1} parent=67 // pred_region
          %s1134 = sand.u32 %s236, 1
          %s1135 = scalar_lea.sflag [#allocation3], %s1134
          %s1136 = sand.u32 %s236, 1
          %s1137 = smul.addr %s1136, 16
          %s1138 = scalar_lea.vmem [#allocation2], %s1137
          %1139 = dma.done %s1135, 256
        $region72: #{tpu_custom_call.1} parent=67 // pred_fallthru
          _
        // Predicated region
        $region73: #{tpu_custom_call.1} parent=67 // pred_check
          %p1140 = pneg %p279
        $region74: #{tpu_custom_call.1} parent=67 // pred_check_branch
          %1142 = sbr.rel (%p1140) target = $region76
        $region75: #{tpu_custom_call.1} parent=67 // pred_region
          %s1143 = sand.u32 %s29, 1
          %s1144 = scalar_lea.sflag [#allocation5], %s1143
          %s1145 = sand.u32 %s264, 1
          %s1146 = smul.addr %s1145, 16
          %s1147 = scalar_lea.vmem [#allocation4], %s1146
          %1148 = dma.done %s1144, 256
        $region76: #{tpu_custom_call.1} parent=67 // pred_fallthru
          _
        // Predicated region
        $region77: #{tpu_custom_call.1} parent=67 // pred_check
          %p1149 = pneg %p307
        $region78: #{tpu_custom_call.1} parent=67 // pred_check_branch
          %1151 = sbr.rel (%p1149) target = $region80
        $region79: #{tpu_custom_call.1} parent=67 // pred_region
          %s1152 = sand.u32 %s29, 1
          %s1153 = scalar_lea.sflag [#allocation5], %s1152
          %s1154 = sand.u32 %s292, 1
          %s1155 = smul.addr %s1154, 16
          %s1156 = scalar_lea.vmem [#allocation6], %s1155
          %1157 = dma.done %s1153, 256
        $region80: #{tpu_custom_call.1} parent=67 // pred_fallthru
          _
      $region68: #{tpu_custom_call.1} parent=5 // pred_fallthru
        _
    $region6: #{tpu_custom_call.1} parent=1 // loop_footer
      %s27 = sadd.s32 1, %s23
    $region7: #{tpu_custom_call.1} parent=1 // loop_footer_branch
      %22 = sbr.rel target = $region3
    $region8: #{tpu_custom_call.1} parent=1 // loop_exit
      _
    %1158 = vsyncpa [#allocation3], 1
    %s1159 = scalar_lea.sflag [#allocation3], 1
    %1160 = vsyncpa %s1159, 1
    %1161 = vsyncpa [#allocation5], 1
    %s1162 = scalar_lea.sflag [#allocation5], 1
    %1163 = vsyncpa %s1162, 1

</llo_original>
